<compile_context>
chip_gen: v7x
topology: tpu7x:2x2x1
jax: 0.10.0
libtpu: 0.0.40
codegen_flags: <defaults>
</compile_context>

<pallas_src>
import functools

import jax
import jax.numpy as jnp
from jax import lax
from jax.experimental import pallas as pl
from jax.experimental.pallas import tpu as pltpu


def _round_up(x, m):
    return (x + m - 1) // m * m


def _pick_row_tile(H):
    for th in (32, 16, 8, 4, 2, 1):
        if th <= H and H % th == 0:
            return th
    return H


def _sepconv_kernel(x_ref, wdw_ref, b1_ref, wpw_ref, b2_ref, out_ref,
                    *, TH, W, Cp_in, Cp_out, use_bf16_mxu):
    """One (batch, row-tile) per grid step.

    x_ref   : (H+2, W+2, Cp_in)   padded NHWC image (resident across row tiles)
    wdw_ref : (3, 3, Cp_in)       depthwise weights with BN1 scale folded in
    b1_ref  : (1, Cp_in)          fused depthwise bias + BN1 shift
    wpw_ref : (Cp_in, Cp_out)     pointwise weights with BN2 scale folded in
    b2_ref  : (1, Cp_out)         fused pointwise bias + BN2 shift
    out_ref : (TH, W, Cp_out)     lane-dense output row tile
    """
    r = pl.program_id(1)
    row0 = pl.multiple_of(r * TH, TH)

    # Halo window of TH+2 rows for this row tile.
    x = x_ref[pl.ds(row0, TH + 2), :, :].astype(jnp.float32)   # (TH+2, W+2, Cp_in)
    wdw = wdw_ref[...].astype(jnp.float32)                     # (3, 3, Cp_in)

    # --- depthwise 3x3 conv (BN1 already folded into weights/bias) + ReLU ----
    acc = jnp.zeros((TH, W, Cp_in), dtype=jnp.float32)
    for dh in range(3):
        for dw in range(3):
            acc = acc + x[dh:dh + TH, dw:dw + W, :] * wdw[dh, dw]
    acc = acc + b1_ref[...].astype(jnp.float32)
    acc = jnp.maximum(acc, 0.0)

    # --- pointwise 1x1 conv == (TH*W, Cp_in) x (Cp_in, Cp_out) MXU matmul ----
    lhs = acc.reshape(TH * W, Cp_in)
    rhs = wpw_ref[...]
    if use_bf16_mxu:          # v6e/v7x fast path: bf16 inputs, f32 accumulation
        lhs = lhs.astype(jnp.bfloat16)
        rhs = rhs.astype(jnp.bfloat16)
    else:
        rhs = rhs.astype(jnp.float32)
    y = jnp.dot(lhs, rhs, preferred_element_type=jnp.float32)

    # --- fused pointwise bias + BN2 shift, ReLU -------------------------------
    y = y + b2_ref[...].astype(jnp.float32)
    y = jnp.maximum(y, 0.0)

    out_ref[...] = y.reshape(TH, W, Cp_out).astype(out_ref.dtype)


def separable_conv_pallas(x_nchw, params, *, use_bf16_mxu=False):
    """Separable-conv forward. Input/output are NCHW (PyTorch convention)."""
    wdw, bdw, g1, b1, m1, v1, wpw, bpw, g2, b2, m2, v2 = params
    eps = 1e-5

    N, C_in, H, W = x_nchw.shape
    C_out = wpw.shape[1]
    Cp_in = _round_up(C_in, 128)
    Cp_out = _round_up(C_out, 128)
    TH = _pick_row_tile(H)

    # --- Fold BatchNorm running stats into the conv weights / biases ---------
    s1 = g1 / jnp.sqrt(v1 + eps)
    s2 = g2 / jnp.sqrt(v2 + eps)
    wdw_f = wdw * s1                                  # (3, 3, C_in)
    b1_f = (bdw - m1) * s1 + b1                       # (C_in,)
    wpw_f = wpw * s2                                  # (C_in, C_out)
    b2_f = (bpw - m2) * s2 + b2                       # (C_out,)

    # --- Zero-pad channels to the 128-lane width ------------------------------
    wdw_p = jnp.pad(wdw_f, ((0, 0), (0, 0), (0, Cp_in - C_in)))
    b1_p = jnp.pad(b1_f, (0, Cp_in - C_in)).reshape(1, Cp_in)
    wpw_p = jnp.pad(wpw_f, ((0, Cp_in - C_in), (0, Cp_out - C_out)))
    b2_p = jnp.pad(b2_f, (0, Cp_out - C_out)).reshape(1, Cp_out)

    # NCHW -> NHWC; one pad op: +1 spatial halo and zero channel padding.
    x = jnp.transpose(x_nchw, (0, 2, 3, 1))
    x_p = jnp.pad(x, ((0, 0), (1, 1), (1, 1), (0, Cp_in - C_in)))

    kernel = functools.partial(_sepconv_kernel, TH=TH, W=W,
                               Cp_in=Cp_in, Cp_out=Cp_out,
                               use_bf16_mxu=use_bf16_mxu)

    full = lambda a: pl.BlockSpec(a.shape, lambda n, r: (0,) * a.ndim)

    out_nhwc = pl.pallas_call(
        kernel,
        out_shape=jax.ShapeDtypeStruct((N, H, W, Cp_out), x_nchw.dtype),
        grid_spec=pltpu.PrefetchScalarGridSpec(
            num_scalar_prefetch=0,
            grid=(N, H // TH),
            in_specs=[
                # batch dim squeezed; block index ignores r -> fetched once per n
                pl.BlockSpec((None, H + 2, W + 2, Cp_in),
                             lambda n, r: (n, 0, 0, 0)),
                full(wdw_p), full(b1_p), full(wpw_p), full(b2_p),
            ],
            out_specs=pl.BlockSpec((None, TH, W, Cp_out),
                                   lambda n, r: (n, r, 0, 0)),
        ),
        compiler_params=pltpu.CompilerParams(
            dimension_semantics=("parallel", "parallel")),
    )(x_p, wdw_p, b1_p, wpw_p, b2_p)

    # Drop padded output channels, NHWC -> NCHW.
    return jnp.transpose(out_nhwc[..., :C_out], (0, 3, 1, 2))


def separable_conv_reference(x_nchw, params):
    """Pure-JAX reference (unfused BN, lax convs) for correctness checking."""
    wdw, bdw, g1, b1, m1, v1, wpw, bpw, g2, b2, m2, v2 = params
    eps = 1e-5
    C_in = x_nchw.shape[1]

    x = jnp.transpose(x_nchw, (0, 2, 3, 1)).astype(jnp.float32)  # NHWC

    # depthwise: HWIO kernel with I=1, feature_group_count=C_in
    k_dw = wdw.reshape(3, 3, 1, C_in).astype(jnp.float32)
    y = lax.conv_general_dilated(
        x, k_dw, window_strides=(1, 1), padding="SAME",
        dimension_numbers=("NHWC", "HWIO", "NHWC"),
        feature_group_count=C_in)
    y = y + bdw
    y = (y - m1) / jnp.sqrt(v1 + eps) * g1 + b1
    y = jnp.maximum(y, 0.0)

    # pointwise 1x1
    y = jnp.einsum("nhwc,co->nhwo", y, wpw.astype(jnp.float32)) + bpw
    y = (y - m2) / jnp.sqrt(v2 + eps) * g2 + b2
    y = jnp.maximum(y, 0.0)

    return jnp.transpose(y, (0, 3, 1, 2)).astype(x_nchw.dtype)


def make_params(key, C_in, C_out):
    # NOTE: PyTorch's depthwise Conv2d weight is (C_in, 1, 3, 3); loading a real
    # checkpoint would require a transpose to this (3, 3, C_in) layout in glue.
    ks = jax.random.split(key, 8)
    wdw = jax.random.normal(ks[0], (3, 3, C_in), jnp.float32) * 0.2   # depthwise 3x3
    bdw = jax.random.normal(ks[1], (C_in,), jnp.float32) * 0.1
    g1 = 1.0 + 0.1 * jax.random.normal(ks[2], (C_in,), jnp.float32)   # BN1
    b1 = 0.1 * jax.random.normal(ks[3], (C_in,), jnp.float32)
    m1 = jnp.zeros((C_in,), jnp.float32)
    v1 = jnp.ones((C_in,), jnp.float32)
    wpw = jax.random.normal(ks[4], (C_in, C_out), jnp.float32) * 0.2  # pointwise 1x1
    bpw = jax.random.normal(ks[5], (C_out,), jnp.float32) * 0.1
    g2 = 1.0 + 0.1 * jax.random.normal(ks[6], (C_out,), jnp.float32)  # BN2
    b2 = 0.1 * jax.random.normal(ks[7], (C_out,), jnp.float32)
    m2 = jnp.zeros((C_out,), jnp.float32)
    v2 = jnp.ones((C_out,), jnp.float32)
    return (wdw, bdw, g1, b1, m1, v1, wpw, bpw, g2, b2, m2, v2)


if __name__ == "__main__":
    key = jax.random.PRNGKey(0)
    k_x, k_p = jax.random.split(key)

    N, C_in, H, W = 2, 4, 16, 16
    C_out = 8
    x = jax.random.normal(k_x, (N, C_in, H, W), jnp.float32)
    params = make_params(k_p, C_in, C_out)

    out = separable_conv_pallas(x, params)          # f32 MXU path (exact)
    out = jax.block_until_ready(out)

    ref = jax.block_until_ready(separable_conv_reference(x, params))
    assert out.shape == (N, C_out, H, W), out.shape
    assert jnp.allclose(out, ref, atol=1e-4, rtol=1e-4), \
        float(jnp.max(jnp.abs(out - ref)))

    # bf16-MXU fast path (v6e/v7x): looser tolerance.
    out_bf16 = jax.block_until_ready(
        separable_conv_pallas(x, params, use_bf16_mxu=True))
    assert jnp.allclose(out_bf16, ref, atol=5e-2, rtol=5e-2), \
        float(jnp.max(jnp.abs(out_bf16 - ref)))

    print("KERNEL_OK")
</pallas_src>

<mosaic_0001>
module attributes {stable_mosaic.version = 11 : i64} {
  func.func @_sepconv_kernel(%arg0: i32, %arg1: i32, %arg2: memref<1x18x18x128xf32, #tpu.memory_space<vmem>>, %arg3: memref<3x3x128xf32, #tpu.memory_space<vmem>>, %arg4: memref<1x128xf32, #tpu.memory_space<vmem>>, %arg5: memref<128x128xf32, #tpu.memory_space<vmem>>, %arg6: memref<1x128xf32, #tpu.memory_space<vmem>>, %arg7: memref<1x16x16x128xf32, #tpu.memory_space<vmem>>) attributes {dimension_semantics = [#tpu.dimension_semantics<parallel>, #tpu.dimension_semantics<parallel>], iteration_bounds = array<i64: 2, 1>, scalar_prefetch = 0 : i64, scratch_operands = 0 : i64, tpu.core_type = #tpu.core_type<tc>, window_params = [{transform_indices = @transform_0, window_bounds = array<i64: 1, 18, 18, 128>}, {pipeline_mode = #tpu.pipeline_mode<synchronous>, transform_indices = @transform_1, window_bounds = array<i64: 3, 3, 128>}, {pipeline_mode = #tpu.pipeline_mode<synchronous>, transform_indices = @transform_2, window_bounds = array<i64: 1, 128>}, {pipeline_mode = #tpu.pipeline_mode<synchronous>, transform_indices = @transform_3, window_bounds = array<i64: 128, 128>}, {pipeline_mode = #tpu.pipeline_mode<synchronous>, transform_indices = @transform_4, window_bounds = array<i64: 1, 128>}, {transform_indices = @transform_5, window_bounds = array<i64: 1, 16, 16, 128>}]} {
    %c16_i32 = arith.constant 16 : i32
    %0 = arith.muli %arg1, %c16_i32 : i32
    %1 = tpu.assume_multiple %0, 16 : i32
    %c0 = arith.constant 0 : index
    %2 = arith.index_cast %1 : i32 to index
    %c0_0 = arith.constant 0 : index
    %c0_1 = arith.constant 0 : index
    %3 = vector.load %arg2[%c0, %2, %c0_0, %c0_1] : memref<1x18x18x128xf32, #tpu.memory_space<vmem>>, vector<1x18x18x128xf32>
    %4 = vector.shape_cast %3 : vector<1x18x18x128xf32> to vector<18x18x128xf32>
    %c0_2 = arith.constant 0 : index
    %c0_3 = arith.constant 0 : index
    %c0_4 = arith.constant 0 : index
    %5 = vector.load %arg3[%c0_2, %c0_3, %c0_4] : memref<3x3x128xf32, #tpu.memory_space<vmem>>, vector<3x3x128xf32>
    %cst = arith.constant 0.000000e+00 : f32
    %6 = vector.broadcast %cst : f32 to vector<16x16x128xf32>
    %7 = vector.extract_strided_slice %4 {offsets = [0, 0, 0], sizes = [16, 16, 128], strides = [1, 1, 1]} : vector<18x18x128xf32> to vector<16x16x128xf32>
    %8 = vector.extract_strided_slice %5 {offsets = [0, 0, 0], sizes = [1, 1, 128], strides = [1, 1, 1]} : vector<3x3x128xf32> to vector<1x1x128xf32>
    %9 = vector.shape_cast %8 : vector<1x1x128xf32> to vector<128xf32>
    %10 = vector.shape_cast %9 : vector<128xf32> to vector<1x1x128xf32>
    %11 = vector.broadcast %10 : vector<1x1x128xf32> to vector<16x16x128xf32>
    %12 = arith.mulf %7, %11 : vector<16x16x128xf32>
    %13 = arith.addf %6, %12 : vector<16x16x128xf32>
    %14 = vector.extract_strided_slice %4 {offsets = [0, 1, 0], sizes = [16, 16, 128], strides = [1, 1, 1]} : vector<18x18x128xf32> to vector<16x16x128xf32>
    %15 = vector.extract_strided_slice %5 {offsets = [0, 1, 0], sizes = [1, 1, 128], strides = [1, 1, 1]} : vector<3x3x128xf32> to vector<1x1x128xf32>
    %16 = vector.shape_cast %15 : vector<1x1x128xf32> to vector<128xf32>
    %17 = vector.shape_cast %16 : vector<128xf32> to vector<1x1x128xf32>
    %18 = vector.broadcast %17 : vector<1x1x128xf32> to vector<16x16x128xf32>
    %19 = arith.mulf %14, %18 : vector<16x16x128xf32>
    %20 = arith.addf %13, %19 : vector<16x16x128xf32>
    %21 = vector.extract_strided_slice %4 {offsets = [0, 2, 0], sizes = [16, 16, 128], strides = [1, 1, 1]} : vector<18x18x128xf32> to vector<16x16x128xf32>
    %22 = vector.extract_strided_slice %5 {offsets = [0, 2, 0], sizes = [1, 1, 128], strides = [1, 1, 1]} : vector<3x3x128xf32> to vector<1x1x128xf32>
    %23 = vector.shape_cast %22 : vector<1x1x128xf32> to vector<128xf32>
    %24 = vector.shape_cast %23 : vector<128xf32> to vector<1x1x128xf32>
    %25 = vector.broadcast %24 : vector<1x1x128xf32> to vector<16x16x128xf32>
    %26 = arith.mulf %21, %25 : vector<16x16x128xf32>
    %27 = arith.addf %20, %26 : vector<16x16x128xf32>
    %28 = vector.extract_strided_slice %4 {offsets = [1, 0, 0], sizes = [16, 16, 128], strides = [1, 1, 1]} : vector<18x18x128xf32> to vector<16x16x128xf32>
    %29 = vector.extract_strided_slice %5 {offsets = [1, 0, 0], sizes = [1, 1, 128], strides = [1, 1, 1]} : vector<3x3x128xf32> to vector<1x1x128xf32>
    %30 = vector.shape_cast %29 : vector<1x1x128xf32> to vector<128xf32>
    %31 = vector.shape_cast %30 : vector<128xf32> to vector<1x1x128xf32>
    %32 = vector.broadcast %31 : vector<1x1x128xf32> to vector<16x16x128xf32>
    %33 = arith.mulf %28, %32 : vector<16x16x128xf32>
    %34 = arith.addf %27, %33 : vector<16x16x128xf32>
    %35 = vector.extract_strided_slice %4 {offsets = [1, 1, 0], sizes = [16, 16, 128], strides = [1, 1, 1]} : vector<18x18x128xf32> to vector<16x16x128xf32>
    %36 = vector.extract_strided_slice %5 {offsets = [1, 1, 0], sizes = [1, 1, 128], strides = [1, 1, 1]} : vector<3x3x128xf32> to vector<1x1x128xf32>
    %37 = vector.shape_cast %36 : vector<1x1x128xf32> to vector<128xf32>
    %38 = vector.shape_cast %37 : vector<128xf32> to vector<1x1x128xf32>
    %39 = vector.broadcast %38 : vector<1x1x128xf32> to vector<16x16x128xf32>
    %40 = arith.mulf %35, %39 : vector<16x16x128xf32>
    %41 = arith.addf %34, %40 : vector<16x16x128xf32>
    %42 = vector.extract_strided_slice %4 {offsets = [1, 2, 0], sizes = [16, 16, 128], strides = [1, 1, 1]} : vector<18x18x128xf32> to vector<16x16x128xf32>
    %43 = vector.extract_strided_slice %5 {offsets = [1, 2, 0], sizes = [1, 1, 128], strides = [1, 1, 1]} : vector<3x3x128xf32> to vector<1x1x128xf32>
    %44 = vector.shape_cast %43 : vector<1x1x128xf32> to vector<128xf32>
    %45 = vector.shape_cast %44 : vector<128xf32> to vector<1x1x128xf32>
    %46 = vector.broadcast %45 : vector<1x1x128xf32> to vector<16x16x128xf32>
    %47 = arith.mulf %42, %46 : vector<16x16x128xf32>
    %48 = arith.addf %41, %47 : vector<16x16x128xf32>
    %49 = vector.extract_strided_slice %4 {offsets = [2, 0, 0], sizes = [16, 16, 128], strides = [1, 1, 1]} : vector<18x18x128xf32> to vector<16x16x128xf32>
    %50 = vector.extract_strided_slice %5 {offsets = [2, 0, 0], sizes = [1, 1, 128], strides = [1, 1, 1]} : vector<3x3x128xf32> to vector<1x1x128xf32>
    %51 = vector.shape_cast %50 : vector<1x1x128xf32> to vector<128xf32>
    %52 = vector.shape_cast %51 : vector<128xf32> to vector<1x1x128xf32>
    %53 = vector.broadcast %52 : vector<1x1x128xf32> to vector<16x16x128xf32>
    %54 = arith.mulf %49, %53 : vector<16x16x128xf32>
    %55 = arith.addf %48, %54 : vector<16x16x128xf32>
    %56 = vector.extract_strided_slice %4 {offsets = [2, 1, 0], sizes = [16, 16, 128], strides = [1, 1, 1]} : vector<18x18x128xf32> to vector<16x16x128xf32>
    %57 = vector.extract_strided_slice %5 {offsets = [2, 1, 0], sizes = [1, 1, 128], strides = [1, 1, 1]} : vector<3x3x128xf32> to vector<1x1x128xf32>
    %58 = vector.shape_cast %57 : vector<1x1x128xf32> to vector<128xf32>
    %59 = vector.shape_cast %58 : vector<128xf32> to vector<1x1x128xf32>
    %60 = vector.broadcast %59 : vector<1x1x128xf32> to vector<16x16x128xf32>
    %61 = arith.mulf %56, %60 : vector<16x16x128xf32>
    %62 = arith.addf %55, %61 : vector<16x16x128xf32>
    %63 = vector.extract_strided_slice %4 {offsets = [2, 2, 0], sizes = [16, 16, 128], strides = [1, 1, 1]} : vector<18x18x128xf32> to vector<16x16x128xf32>
    %64 = vector.extract_strided_slice %5 {offsets = [2, 2, 0], sizes = [1, 1, 128], strides = [1, 1, 1]} : vector<3x3x128xf32> to vector<1x1x128xf32>
    %65 = vector.shape_cast %64 : vector<1x1x128xf32> to vector<128xf32>
    %66 = vector.shape_cast %65 : vector<128xf32> to vector<1x1x128xf32>
    %67 = vector.broadcast %66 : vector<1x1x128xf32> to vector<16x16x128xf32>
    %68 = arith.mulf %63, %67 : vector<16x16x128xf32>
    %69 = arith.addf %62, %68 : vector<16x16x128xf32>
    %c0_5 = arith.constant 0 : index
    %c0_6 = arith.constant 0 : index
    %70 = vector.load %arg4[%c0_5, %c0_6] : memref<1x128xf32, #tpu.memory_space<vmem>>, vector<1x128xf32>
    %71 = vector.shape_cast %70 : vector<1x128xf32> to vector<1x1x128xf32>
    %72 = vector.broadcast %71 : vector<1x1x128xf32> to vector<16x16x128xf32>
    %73 = arith.addf %69, %72 : vector<16x16x128xf32>
    %cst_7 = arith.constant 0.000000e+00 : f32
    %74 = vector.broadcast %cst_7 : f32 to vector<16x16x128xf32>
    %75 = arith.maximumf %73, %74 : vector<16x16x128xf32>
    %76 = vector.shape_cast %75 : vector<16x16x128xf32> to vector<256x128xf32>
    %c0_8 = arith.constant 0 : index
    %c0_9 = arith.constant 0 : index
    %77 = vector.load %arg5[%c0_8, %c0_9] : memref<128x128xf32, #tpu.memory_space<vmem>>, vector<128x128xf32>
    %cst_10 = arith.constant dense<0.000000e+00> : vector<256x128xf32>
    %78 = tpu.matmul %76, %77, %cst_10 {dimension_numbers = #tpu.dot_dimension_numbers<[1], [0], [0], [1], [0, 0, 1, 1], [], []>} : vector<256x128xf32>, vector<128x128xf32>, vector<256x128xf32> -> vector<256x128xf32>
    %c0_11 = arith.constant 0 : index
    %c0_12 = arith.constant 0 : index
    %79 = vector.load %arg6[%c0_11, %c0_12] : memref<1x128xf32, #tpu.memory_space<vmem>>, vector<1x128xf32>
    %80 = vector.broadcast %79 : vector<1x128xf32> to vector<256x128xf32>
    %81 = arith.addf %78, %80 : vector<256x128xf32>
    %cst_13 = arith.constant 0.000000e+00 : f32
    %82 = vector.broadcast %cst_13 : f32 to vector<256x128xf32>
    %83 = arith.maximumf %81, %82 : vector<256x128xf32>
    %84 = vector.shape_cast %83 : vector<256x128xf32> to vector<16x16x128xf32>
    %c0_14 = arith.constant 0 : index
    %c0_15 = arith.constant 0 : index
    %c0_16 = arith.constant 0 : index
    %c0_17 = arith.constant 0 : index
    %85 = vector.load %arg7[%c0_14, %c0_15, %c0_16, %c0_17] : memref<1x16x16x128xf32, #tpu.memory_space<vmem>>, vector<1x16x16x128xf32>
    %86 = vector.shape_cast %85 : vector<1x16x16x128xf32> to vector<16x16x128xf32>
    %87 = vector.shape_cast %84 : vector<16x16x128xf32> to vector<1x16x16x128xf32>
    tpu.vector_store %arg7[%c0_14, %c0_15, %c0_16, %c0_17], %87 {strides = array<i32>} : memref<1x16x16x128xf32, #tpu.memory_space<vmem>>, vector<1x16x16x128xf32>,
    return
  }
  func.func @transform_0(%arg0: i32, %arg1: i32) -> (i32, i32, i32, i32) {
    %c0_i32 = arith.constant 0 : i32
    %c0_i32_0 = arith.constant 0 : i32
    %c0_i32_1 = arith.constant 0 : i32
    %c0_i32_2 = arith.constant 0 : i32
    return %arg0, %c0_i32, %c0_i32_0, %c0_i32_1 : i32, i32, i32, i32
  }
  func.func @transform_1(%arg0: i32, %arg1: i32) -> (i32, i32, i32) {
    %c0_i32 = arith.constant 0 : i32
    %c0_i32_0 = arith.constant 0 : i32
    %c0_i32_1 = arith.constant 0 : i32
    %c0_i32_2 = arith.constant 0 : i32
    return %c0_i32, %c0_i32_0, %c0_i32_1 : i32, i32, i32
  }
  func.func @transform_2(%arg0: i32, %arg1: i32) -> (i32, i32) {
    %c0_i32 = arith.constant 0 : i32
    %c0_i32_0 = arith.constant 0 : i32
    %c0_i32_1 = arith.constant 0 : i32
    return %c0_i32, %c0_i32_0 : i32, i32
  }
  func.func @transform_3(%arg0: i32, %arg1: i32) -> (i32, i32) {
    %c0_i32 = arith.constant 0 : i32
    %c0_i32_0 = arith.constant 0 : i32
    %c0_i32_1 = arith.constant 0 : i32
    return %c0_i32, %c0_i32_0 : i32, i32
  }
  func.func @transform_4(%arg0: i32, %arg1: i32) -> (i32, i32) {
    %c0_i32 = arith.constant 0 : i32
    %c0_i32_0 = arith.constant 0 : i32
    %c0_i32_1 = arith.constant 0 : i32
    return %c0_i32, %c0_i32_0 : i32, i32
  }
  func.func @transform_5(%arg0: i32, %arg1: i32) -> (i32, i32, i32, i32) {
    %c0_i32 = arith.constant 0 : i32
    %c0_i32_0 = arith.constant 0 : i32
    %c0_i32_1 = arith.constant 0 : i32
    return %arg0, %arg1, %c0_i32, %c0_i32_0 : i32, i32, i32, i32
  }
}

</mosaic_0001>

<llo_original>
// kernel: tpu_custom_call.1
$region0: #{tpu_custom_call.1}
  #allocation0 [shape = 'u32[]', space=smem, size = 0x4, offset = 0x4, fixed_abs, tag = 'smem constant byte address 0x4 - core index']
  #allocation1 [shape = 'u32[144,128]{1,0:T(1,128)}', space=vmem, size = 0x12000, scoped, tag = 'internal scratch']
  %s0 = inlined_call_operand.vmem [shape: f32[2,18,18,128], index: 0, kind: input, shape index: {}]
  %s1 = inlined_call_operand.vmem [shape: f32[3,3,128], index: 1, kind: input, shape index: {}]
  %s2 = inlined_call_operand.vmem [shape: f32[1,128], index: 2, kind: input, shape index: {}]
  %s3 = inlined_call_operand.vmem [shape: f32[128,128], index: 3, kind: input, shape index: {}]
  %s4 = inlined_call_operand.vmem [shape: f32[1,128], index: 4, kind: input, shape index: {}]
  %s5 = inlined_call_operand.hbm [shape: f32[2,16,16,128], index: 5, kind: output, shape index: {}]
  %s6 = sld [smem:[#allocation0]]
  $region53: #{tpu_custom_call.1} parent=0
    _
  %s8 = ssub.s32 1, %s6
  %s9 = scalar_select 0, %s8, %s6
  $region1: #{tpu_custom_call.1} parent=0
    #allocation2 [shape = 'u8[262144]{0}', space=vmem, size = 0x40000, scoped, tag = 'output window, operand 0']
    #allocation3 [shape = 's32[2]{0}', space=sflag, size = 0x8, scoped, tag = 'scoped memory for tpu_custom_call.1']
    %10 = vsyncpa [#allocation3], 0
    %s11 = scalar_lea.sflag [#allocation3], 1
    %12 = vsyncpa %s11, 0
    loop: start=0, step=1, limit=4
    $region2: #{tpu_custom_call.1} parent=1 // loop_pre_header
      _
    $region3: #{tpu_custom_call.1} parent=1 // loop_header
      %s14 = sphi 0, %s18
      %p15 = scmp.ge.s32.totalorder %s14, 4
      %s21 = sphi 0, %s33
      %s22 = sphi 0, %s29
      %s23 = sphi 0, %s21
      %s24 = sphi 0, %s22
      %s25 = sphi 0, %s23
      %s26 = sphi 0, %s24
      %s36 = sphi 0, %s38
      %s39 = sphi 0, %s36
      %s40 = sphi 0, %s39
      %s56 = sphi 0, %s40
      %s60 = sphi 0, %s60
      %s62 = sphi 0, %s60
      %s63 = sphi 0, %s62
      %s77 = sphi 0, %s63
      %s81 = sphi 0, %s81
      %s83 = sphi 0, %s81
      %s84 = sphi 0, %s83
      %s98 = sphi 0, %s84
      %s102 = sphi 0, %s102
      %s104 = sphi 0, %s102
      %s105 = sphi 0, %s104
      %s119 = sphi 0, %s105
      %s123 = sphi 0, %s123
      %s125 = sphi 0, %s123
      %s126 = sphi 0, %s125
      %s140 = sphi 0, %s126
      %s148 = sphi 0, %s150
      %s151 = sphi 0, %s148
      %s152 = sphi 0, %s151
      %s168 = sphi 0, %s152
    $region4: #{tpu_custom_call.1} parent=1 // loop_header_branch
      %17 = sbr.rel (%p15) target = $region8
    $region5: #{tpu_custom_call.1} parent=1 // loop_body
      %s19 = ssub.s32 %s14, 1
      %s20 = ssub.s32 %s14, 2
      %s27 = sadd.s32 1, %s22
      %p28 = scmp.ge.s32.totalorder %s27, 1
      %s29 = scalar_select %p28, 0, %s27
      %s30 = sadd.s32 1, %s21
      %s31 = scalar_select %p28, %s30, %s21
      %p32 = scmp.ge.s32.totalorder %s31, 2
      %s33 = scalar_select %p32, 0, %s31
      %s34 = ssub.s32 %s21, %s33
      %p35 = scmp.eq.s32.totalorder %s34, 0
      %s37 = sadd.s32 %s36, 1
      %s38 = scalar_select %p35, %s36, %s37
      %p41 = pneg %p35
      %p42 = scmp.eq.s32.totalorder %s14, 1
      %p43 = por %p41, %p42
      %p44 = scmp.ne.s32.totalorder %s36, %s39
      %p45 = scmp.eq.s32.totalorder %s14, 0
      %p46 = por %p44, %p45
      %p47 = scmp.ne.s32.totalorder %s36, %s39
      %p48 = scmp.eq.s32.totalorder %s19, 1
      %p49 = por %p47, %p48
      %p50 = scmp.ne.s32.totalorder %s39, %s40
      %p51 = scmp.eq.s32.totalorder %s19, 0
      %p52 = por %p50, %p51
      %p53 = scmp.ne.s32.totalorder %s39, %s40
      %p54 = scmp.eq.s32.totalorder %s20, 1
      %p55 = por %p53, %p54
      %p57 = scmp.ne.s32.totalorder %s40, %s56
      %p58 = scmp.eq.s32.totalorder %s20, 0
      %p59 = por %p57, %p58
      %s61 = sadd.s32 %s60, 1
      %p64 = scmp.eq.s32.totalorder %s14, 1
      %p65 = scmp.ne.s32.totalorder %s60, %s62
      %p66 = scmp.eq.s32.totalorder %s14, 0
      %p67 = por %p65, %p66
      %p68 = scmp.ne.s32.totalorder %s60, %s62
      %p69 = scmp.eq.s32.totalorder %s19, 1
      %p70 = por %p68, %p69
      %p71 = scmp.ne.s32.totalorder %s62, %s63
      %p72 = scmp.eq.s32.totalorder %s19, 0
      %p73 = por %p71, %p72
      %p74 = scmp.ne.s32.totalorder %s62, %s63
      %p75 = scmp.eq.s32.totalorder %s20, 1
      %p76 = por %p74, %p75
      %p78 = scmp.ne.s32.totalorder %s63, %s77
      %p79 = scmp.eq.s32.totalorder %s20, 0
      %p80 = por %p78, %p79
      %s82 = sadd.s32 %s81, 1
      %p85 = scmp.eq.s32.totalorder %s14, 1
      %p86 = scmp.ne.s32.totalorder %s81, %s83
      %p87 = scmp.eq.s32.totalorder %s14, 0
      %p88 = por %p86, %p87
      %p89 = scmp.ne.s32.totalorder %s81, %s83
      %p90 = scmp.eq.s32.totalorder %s19, 1
      %p91 = por %p89, %p90
      %p92 = scmp.ne.s32.totalorder %s83, %s84
      %p93 = scmp.eq.s32.totalorder %s19, 0
      %p94 = por %p92, %p93
      %p95 = scmp.ne.s32.totalorder %s83, %s84
      %p96 = scmp.eq.s32.totalorder %s20, 1
      %p97 = por %p95, %p96
      %p99 = scmp.ne.s32.totalorder %s84, %s98
      %p100 = scmp.eq.s32.totalorder %s20, 0
      %p101 = por %p99, %p100
      %s103 = sadd.s32 %s102, 1
      %p106 = scmp.eq.s32.totalorder %s14, 1
      %p107 = scmp.ne.s32.totalorder %s102, %s104
      %p108 = scmp.eq.s32.totalorder %s14, 0
      %p109 = por %p107, %p108
      %p110 = scmp.ne.s32.totalorder %s102, %s104
      %p111 = scmp.eq.s32.totalorder %s19, 1
      %p112 = por %p110, %p111
      %p113 = scmp.ne.s32.totalorder %s104, %s105
      %p114 = scmp.eq.s32.totalorder %s19, 0
      %p115 = por %p113, %p114
      %p116 = scmp.ne.s32.totalorder %s104, %s105
      %p117 = scmp.eq.s32.totalorder %s20, 1
      %p118 = por %p116, %p117
      %p120 = scmp.ne.s32.totalorder %s105, %s119
      %p121 = scmp.eq.s32.totalorder %s20, 0
      %p122 = por %p120, %p121
      %s124 = sadd.s32 %s123, 1
      %p127 = scmp.eq.s32.totalorder %s14, 1
      %p128 = scmp.ne.s32.totalorder %s123, %s125
      %p129 = scmp.eq.s32.totalorder %s14, 0
      %p130 = por %p128, %p129
      %p131 = scmp.ne.s32.totalorder %s123, %s125
      %p132 = scmp.eq.s32.totalorder %s19, 1
      %p133 = por %p131, %p132
      %p134 = scmp.ne.s32.totalorder %s125, %s126
      %p135 = scmp.eq.s32.totalorder %s19, 0
      %p136 = por %p134, %p135
      %p137 = scmp.ne.s32.totalorder %s125, %s126
      %p138 = scmp.eq.s32.totalorder %s20, 1
      %p139 = por %p137, %p138
      %p141 = scmp.ne.s32.totalorder %s126, %s140
      %p142 = scmp.eq.s32.totalorder %s20, 0
      %p143 = por %p141, %p142
      %s144 = ssub.s32 %s21, %s33
      %s145 = ssub.s32 %s22, %s29
      %s146 = sor.u32 %s144, %s145
      %p147 = scmp.eq.s32.totalorder %s146, 0
      %s149 = sadd.s32 %s148, 1
      %s150 = scalar_select %p147, %s148, %s149
      %p153 = pneg %p147
      %p154 = scmp.eq.s32.totalorder %s14, 1
      %p155 = por %p153, %p154
      %p156 = scmp.ne.s32.totalorder %s148, %s151
      %p157 = scmp.eq.s32.totalorder %s14, 0
      %p158 = por %p156, %p157
      %p159 = scmp.ne.s32.totalorder %s148, %s151
      %p160 = scmp.eq.s32.totalorder %s19, 1
      %p161 = por %p159, %p160
      %p162 = scmp.ne.s32.totalorder %s151, %s152
      %p163 = scmp.eq.s32.totalorder %s19, 0
      %p164 = por %p162, %p163
      %p165 = scmp.ne.s32.totalorder %s151, %s152
      %p166 = scmp.eq.s32.totalorder %s20, 1
      %p167 = por %p165, %p166
      %p169 = scmp.ne.s32.totalorder %s152, %s168
      %p170 = scmp.eq.s32.totalorder %s20, 0
      %p171 = por %p169, %p170
      %p172 = scmp.le.s32.totalorder 1, %s14
      %p173 = scmp.lt.s32.totalorder %s14, 3
      %p174 = pnand %p172, %p173
      %p175 = pneg %p174
      // Predicated region
      $region9: #{tpu_custom_call.1} parent=5 // pred_check
        _
      $region10: #{tpu_custom_call.1} parent=5 // pred_check_branch
        %177 = sbr.rel (%p174) target = $region12
      $region11: #{tpu_custom_call.1} parent=5 // pred_region
        %s178 = ssub.s32 %s14, 1
        // Predicated region
        $region13: #{tpu_custom_call.1} parent=11 // pred_check
          %p179 = pneg %p73
        $region14: #{tpu_custom_call.1} parent=11 // pred_check_branch
          %181 = sbr.rel (%p179) target = $region16
        $region15: #{tpu_custom_call.1} parent=11 // pred_region
          _
        $region16: #{tpu_custom_call.1} parent=11 // pred_fallthru
          _
        // Predicated region
        $region17: #{tpu_custom_call.1} parent=11 // pred_check
          %p182 = pneg %p94
        $region18: #{tpu_custom_call.1} parent=11 // pred_check_branch
          %184 = sbr.rel (%p182) target = $region20
        $region19: #{tpu_custom_call.1} parent=11 // pred_region
          _
        $region20: #{tpu_custom_call.1} parent=11 // pred_fallthru
          _
        // Predicated region
        $region21: #{tpu_custom_call.1} parent=11 // pred_check
          %p185 = pneg %p115
        $region22: #{tpu_custom_call.1} parent=11 // pred_check_branch
          %187 = sbr.rel (%p185) target = $region24
        $region23: #{tpu_custom_call.1} parent=11 // pred_region
          _
        $region24: #{tpu_custom_call.1} parent=11 // pred_fallthru
          _
        // Predicated region
        $region25: #{tpu_custom_call.1} parent=11 // pred_check
          %p188 = pneg %p136
        $region26: #{tpu_custom_call.1} parent=11 // pred_check_branch
          %190 = sbr.rel (%p188) target = $region28
        $region27: #{tpu_custom_call.1} parent=11 // pred_region
          _
        $region28: #{tpu_custom_call.1} parent=11 // pred_fallthru
          _
      $region12: #{tpu_custom_call.1} parent=5 // pred_fallthru
        _
      %p191 = scmp.lt.s32.totalorder %s14, 2
      // Predicated region
      $region29: #{tpu_custom_call.1} parent=5 // pred_check
        %p192 = pneg %p191
      $region30: #{tpu_custom_call.1} parent=5 // pred_check_branch
        %194 = sbr.rel (%p192) target = $region32
      $region31: #{tpu_custom_call.1} parent=5 // pred_region
        // Predicated region
        $region33: #{tpu_custom_call.1} parent=31 // pred_check
          %p195 = pneg %p46
        $region34: #{tpu_custom_call.1} parent=31 // pred_check_branch
          %197 = sbr.rel (%p195) target = $region36
        $region35: #{tpu_custom_call.1} parent=31 // pred_region
          %p198 = scmp.lt.s32.totalorder %s21, 1
          %s199 = scalar_select %p198, %s21, 1
          %s200 = smul.addr %s199, 54
          %s201 = smul.addr %s200, 8
          %s202 = scalar_lea.vmem %s0, %s201
        $region36: #{tpu_custom_call.1} parent=31 // pred_fallthru
          _
      $region32: #{tpu_custom_call.1} parent=5 // pred_fallthru
        _
      %p203 = scmp.le.s32.totalorder 1, %s14
      %p204 = scmp.lt.s32.totalorder %s14, 3
      %p205 = pnand %p203, %p204
      %p206 = pneg %p205
      // Predicated region
      $region37: #{tpu_custom_call.1} parent=5 // pred_check
        _
      $region38: #{tpu_custom_call.1} parent=5 // pred_check_branch
        %208 = sbr.rel (%p205) target = $region40
      $region39: #{tpu_custom_call.1} parent=5 // pred_region
        %s209 = ssub.s32 %s14, 1
        %p210 = scmp.lt.s32.totalorder %s23, 1
        %s211 = scalar_select %p210, %s23, 1
        %s212 = smul.addr %s211, 54
        %s213 = smul.addr %s212, 8
        %s214 = scalar_lea.vmem %s0, %s213
        %p215 = pneg %p52
        %p216 = pneg %p49
        %p217 = pneg %p73
        %p218 = pneg %p70
        %p219 = pneg %p94
        %p220 = pneg %p91
        %p221 = pneg %p115
        %p222 = pneg %p112
        %p223 = pneg %p136
        %p224 = pneg %p133
        %p225 = pneg %p164
        %p226 = pneg %p161
        %s227 = sand.u32 %s151, 1
        %s228 = scalar_lea.sflag [#allocation3], %s227
        %s229 = sand.u32 %s151, 1
        %s230 = smul.addr %s229, 256
        %s231 = scalar_lea.vmem [#allocation2], %s230
        %p232 = scmp.lt.s32.totalorder %s23, 1
        %s233 = scalar_select %p232, %s23, 1
        %s234 = smul.addr %s233, 54
        %s235 = smul.addr %s234, 8
        %s236 = scalar_lea.vmem %s0, %s235
        %s237 = smul.u32 16, %s24
        %s238 = smul.u32 %s24, 16
        %s239 = smul.u32 %s238, 24
        %s240 = scalar_lea.vmem %s236, %s239
        %v241 = vld [vmem:[%s240] sm:$0xff]
        %v242 = vld [vmem:[%s240 + $0x8] sm:$0xff]
        %v243 = vld [vmem:[%s240 + $0x10] sm:$0x3]
        %v244 = vld [vmem:[%s240 + $0x18] sm:$0xff]
        %v245 = vld [vmem:[%s240 + $0x20] sm:$0xff]
        %v246 = vld [vmem:[%s240 + $0x28] sm:$0x3]
        %v247 = vld [vmem:[%s240 + $0x30] sm:$0xff]
        %v248 = vld [vmem:[%s240 + $0x38] sm:$0xff]
        %v249 = vld [vmem:[%s240 + $0x40] sm:$0x3]
        %v250 = vld [vmem:[%s240 + $0x48] sm:$0xff]
        %v251 = vld [vmem:[%s240 + $0x50] sm:$0xff]
        %v252 = vld [vmem:[%s240 + $0x58] sm:$0x3]
        %v253 = vld [vmem:[%s240 + $0x60] sm:$0xff]
        %v254 = vld [vmem:[%s240 + $0x68] sm:$0xff]
        %v255 = vld [vmem:[%s240 + $0x70] sm:$0x3]
        %v256 = vld [vmem:[%s240 + $0x78] sm:$0xff]
        %v257 = vld [vmem:[%s240 + $0x80] sm:$0xff]
        %v258 = vld [vmem:[%s240 + $0x88] sm:$0x3]
        %v259 = vld [vmem:[%s240 + $0x90] sm:$0xff]
        %v260 = vld [vmem:[%s240 + $0x98] sm:$0xff]
        %v261 = vld [vmem:[%s240 + $0xa0] sm:$0x3]
        %v262 = vld [vmem:[%s240 + $0xa8] sm:$0xff]
        %v263 = vld [vmem:[%s240 + $0xb0] sm:$0xff]
        %v264 = vld [vmem:[%s240 + $0xb8] sm:$0x3]
        %v265 = vld [vmem:[%s240 + $0xc0] sm:$0xff]
        %v266 = vld [vmem:[%s240 + $0xc8] sm:$0xff]
        %v267 = vld [vmem:[%s240 + $0xd0] sm:$0x3]
        %v268 = vld [vmem:[%s240 + $0xd8] sm:$0xff]
        %v269 = vld [vmem:[%s240 + $0xe0] sm:$0xff]
        %v270 = vld [vmem:[%s240 + $0xe8] sm:$0x3]
        %v271 = vld [vmem:[%s240 + $0xf0] sm:$0xff]
        %v272 = vld [vmem:[%s240 + $0xf8] sm:$0xff]
        %v273 = vld [vmem:[%s240 + $0x100] sm:$0x3]
        %v274 = vld [vmem:[%s240 + $0x108] sm:$0xff]
        %v275 = vld [vmem:[%s240 + $0x110] sm:$0xff]
        %v276 = vld [vmem:[%s240 + $0x118] sm:$0x3]
        %v277 = vld [vmem:[%s240 + $0x120] sm:$0xff]
        %v278 = vld [vmem:[%s240 + $0x128] sm:$0xff]
        %v279 = vld [vmem:[%s240 + $0x130] sm:$0x3]
        %v280 = vld [vmem:[%s240 + $0x138] sm:$0xff]
        %v281 = vld [vmem:[%s240 + $0x140] sm:$0xff]
        %v282 = vld [vmem:[%s240 + $0x148] sm:$0x3]
        %v283 = vld [vmem:[%s240 + $0x150] sm:$0xff]
        %v284 = vld [vmem:[%s240 + $0x158] sm:$0xff]
        %v285 = vld [vmem:[%s240 + $0x160] sm:$0x3]
        %v286 = vld [vmem:[%s240 + $0x168] sm:$0xff]
        %v287 = vld [vmem:[%s240 + $0x170] sm:$0xff]
        %v288 = vld [vmem:[%s240 + $0x178] sm:$0x3]
        %v289 = vld [vmem:[%s240 + $0x180] sm:$0xff]
        %v290 = vld [vmem:[%s240 + $0x188] sm:$0xff]
        %v291 = vld [vmem:[%s240 + $0x190] sm:$0x3]
        %v292 = vld [vmem:[%s240 + $0x198] sm:$0xff]
        %v293 = vld [vmem:[%s240 + $0x1a0] sm:$0xff]
        %v294 = vld [vmem:[%s240 + $0x1a8] sm:$0x3]
        %v295 = vld [vmem:[%s1] sm:$0x7]
        %v296 = vld [vmem:[%s1 + $0x4] sm:$0x7]
        %v297 = vld [vmem:[%s1 + $0x8] sm:$0x7]
        %v298 = vlaneseq
        %v299 = vshrl.u32 %v298, 7
        %v300 = vsub.s32 0, %v299
        %v301 = vrot.slane %v295, %v300
        %v302 = vmul.f32 %v241, %v301
        %v303 = vmul.f32 %v242, %v301
        %v304 = vmul.f32 %v244, %v301
        %v305 = vmul.f32 %v245, %v301
        %v306 = vmul.f32 %v247, %v301
        %v307 = vmul.f32 %v248, %v301
        %v308 = vmul.f32 %v250, %v301
        %v309 = vmul.f32 %v251, %v301
        %v310 = vmul.f32 %v253, %v301
        %v311 = vmul.f32 %v254, %v301
        %v312 = vmul.f32 %v256, %v301
        %v313 = vmul.f32 %v257, %v301
        %v314 = vmul.f32 %v259, %v301
        %v315 = vmul.f32 %v260, %v301
        %v316 = vmul.f32 %v262, %v301
        %v317 = vmul.f32 %v263, %v301
        %v318 = vmul.f32 %v265, %v301
        %v319 = vmul.f32 %v266, %v301
        %v320 = vmul.f32 %v268, %v301
        %v321 = vmul.f32 %v269, %v301
        %v322 = vmul.f32 %v271, %v301
        %v323 = vmul.f32 %v272, %v301
        %v324 = vmul.f32 %v274, %v301
        %v325 = vmul.f32 %v275, %v301
        %v326 = vmul.f32 %v277, %v301
        %v327 = vmul.f32 %v278, %v301
        %v328 = vmul.f32 %v280, %v301
        %v329 = vmul.f32 %v281, %v301
        %v330 = vmul.f32 %v283, %v301
        %v331 = vmul.f32 %v284, %v301
        %v332 = vmul.f32 %v286, %v301
        %v333 = vmul.f32 %v287, %v301
        %v334 = vadd.f32 %v302, 0.0
        %v335 = vadd.f32 %v303, 0.0
        %v336 = vadd.f32 %v304, 0.0
        %v337 = vadd.f32 %v305, 0.0
        %v338 = vadd.f32 %v306, 0.0
        %v339 = vadd.f32 %v307, 0.0
        %v340 = vadd.f32 %v308, 0.0
        %v341 = vadd.f32 %v309, 0.0
        %v342 = vadd.f32 %v310, 0.0
        %v343 = vadd.f32 %v311, 0.0
        %v344 = vadd.f32 %v312, 0.0
        %v345 = vadd.f32 %v313, 0.0
        %v346 = vadd.f32 %v314, 0.0
        %v347 = vadd.f32 %v315, 0.0
        %v348 = vadd.f32 %v316, 0.0
        %v349 = vadd.f32 %v317, 0.0
        %v350 = vadd.f32 %v318, 0.0
        %v351 = vadd.f32 %v319, 0.0
        %v352 = vadd.f32 %v320, 0.0
        %v353 = vadd.f32 %v321, 0.0
        %v354 = vadd.f32 %v322, 0.0
        %v355 = vadd.f32 %v323, 0.0
        %v356 = vadd.f32 %v324, 0.0
        %v357 = vadd.f32 %v325, 0.0
        %v358 = vadd.f32 %v326, 0.0
        %v359 = vadd.f32 %v327, 0.0
        %v360 = vadd.f32 %v328, 0.0
        %v361 = vadd.f32 %v329, 0.0
        %v362 = vadd.f32 %v330, 0.0
        %v363 = vadd.f32 %v331, 0.0
        %v364 = vadd.f32 %v332, 0.0
        %v365 = vadd.f32 %v333, 0.0
        %v366 = vlaneseq
        %v367 = vshrl.u32 %v366, 7
        %v368 = vsub.s32 1, %v367
        %v369 = vrot.slane %v295, %v368
        %v370 = vmul.f32 %v241, %v369
        %v371 = vmul.f32 %v242, %v369
        %v372 = vmul.f32 %v243, %v369
        %v373 = vmul.f32 %v244, %v369
        %v374 = vmul.f32 %v245, %v369
        %v375 = vmul.f32 %v246, %v369
        %v376 = vmul.f32 %v247, %v369
        %v377 = vmul.f32 %v248, %v369
        %v378 = vmul.f32 %v249, %v369
        %v379 = vmul.f32 %v250, %v369
        %v380 = vmul.f32 %v251, %v369
        %v381 = vmul.f32 %v252, %v369
        %v382 = vmul.f32 %v253, %v369
        %v383 = vmul.f32 %v254, %v369
        %v384 = vmul.f32 %v255, %v369
        %v385 = vmul.f32 %v256, %v369
        %v386 = vmul.f32 %v257, %v369
        %v387 = vmul.f32 %v258, %v369
        %v388 = vmul.f32 %v259, %v369
        %v389 = vmul.f32 %v260, %v369
        %v390 = vmul.f32 %v261, %v369
        %v391 = vmul.f32 %v262, %v369
        %v392 = vmul.f32 %v263, %v369
        %v393 = vmul.f32 %v264, %v369
        %v394 = vmul.f32 %v265, %v369
        %v395 = vmul.f32 %v266, %v369
        %v396 = vmul.f32 %v267, %v369
        %v397 = vmul.f32 %v268, %v369
        %v398 = vmul.f32 %v269, %v369
        %v399 = vmul.f32 %v270, %v369
        %v400 = vmul.f32 %v271, %v369
        %v401 = vmul.f32 %v272, %v369
        %v402 = vmul.f32 %v273, %v369
        %v403 = vmul.f32 %v274, %v369
        %v404 = vmul.f32 %v275, %v369
        %v405 = vmul.f32 %v276, %v369
        %v406 = vmul.f32 %v277, %v369
        %v407 = vmul.f32 %v278, %v369
        %v408 = vmul.f32 %v279, %v369
        %v409 = vmul.f32 %v280, %v369
        %v410 = vmul.f32 %v281, %v369
        %v411 = vmul.f32 %v282, %v369
        %v412 = vmul.f32 %v283, %v369
        %v413 = vmul.f32 %v284, %v369
        %v414 = vmul.f32 %v285, %v369
        %v415 = vmul.f32 %v286, %v369
        %v416 = vmul.f32 %v287, %v369
        %v417 = vmul.f32 %v288, %v369
        %vm466 = vcmask 1046528
        %v467 = vrot.slane %v370, 1
        %v468 = vrot.slane %v371, 1
        %v469 = vsel %vm466, %v467, %v468
        %v470 = vrot.slane %v372, 1
        %v471 = vsel %vm466, %v468, %v470
        %v472 = vrot.slane %v373, 1
        %v473 = vrot.slane %v374, 1
        %v474 = vsel %vm466, %v472, %v473
        %v475 = vrot.slane %v375, 1
        %v476 = vsel %vm466, %v473, %v475
        %v477 = vrot.slane %v376, 1
        %v478 = vrot.slane %v377, 1
        %v479 = vsel %vm466, %v477, %v478
        %v480 = vrot.slane %v378, 1
        %v481 = vsel %vm466, %v478, %v480
        %v482 = vrot.slane %v379, 1
        %v483 = vrot.slane %v380, 1
        %v484 = vsel %vm466, %v482, %v483
        %v485 = vrot.slane %v381, 1
        %v486 = vsel %vm466, %v483, %v485
        %v487 = vrot.slane %v382, 1
        %v488 = vrot.slane %v383, 1
        %v489 = vsel %vm466, %v487, %v488
        %v490 = vrot.slane %v384, 1
        %v491 = vsel %vm466, %v488, %v490
        %v492 = vrot.slane %v385, 1
        %v493 = vrot.slane %v386, 1
        %v494 = vsel %vm466, %v492, %v493
        %v495 = vrot.slane %v387, 1
        %v496 = vsel %vm466, %v493, %v495
        %v497 = vrot.slane %v388, 1
        %v498 = vrot.slane %v389, 1
        %v499 = vsel %vm466, %v497, %v498
        %v500 = vrot.slane %v390, 1
        %v501 = vsel %vm466, %v498, %v500
        %v502 = vrot.slane %v391, 1
        %v503 = vrot.slane %v392, 1
        %v504 = vsel %vm466, %v502, %v503
        %v505 = vrot.slane %v393, 1
        %v506 = vsel %vm466, %v503, %v505
        %v507 = vrot.slane %v394, 1
        %v508 = vrot.slane %v395, 1
        %v509 = vsel %vm466, %v507, %v508
        %v510 = vrot.slane %v396, 1
        %v511 = vsel %vm466, %v508, %v510
        %v512 = vrot.slane %v397, 1
        %v513 = vrot.slane %v398, 1
        %v514 = vsel %vm466, %v512, %v513
        %v515 = vrot.slane %v399, 1
        %v516 = vsel %vm466, %v513, %v515
        %v517 = vrot.slane %v400, 1
        %v518 = vrot.slane %v401, 1
        %v519 = vsel %vm466, %v517, %v518
        %v520 = vrot.slane %v402, 1
        %v521 = vsel %vm466, %v518, %v520
        %v522 = vrot.slane %v403, 1
        %v523 = vrot.slane %v404, 1
        %v524 = vsel %vm466, %v522, %v523
        %v525 = vrot.slane %v405, 1
        %v526 = vsel %vm466, %v523, %v525
        %v527 = vrot.slane %v406, 1
        %v528 = vrot.slane %v407, 1
        %v529 = vsel %vm466, %v527, %v528
        %v530 = vrot.slane %v408, 1
        %v531 = vsel %vm466, %v528, %v530
        %v532 = vrot.slane %v409, 1
        %v533 = vrot.slane %v410, 1
        %v534 = vsel %vm466, %v532, %v533
        %v535 = vrot.slane %v411, 1
        %v536 = vsel %vm466, %v533, %v535
        %v537 = vrot.slane %v412, 1
        %v538 = vrot.slane %v413, 1
        %v539 = vsel %vm466, %v537, %v538
        %v540 = vrot.slane %v414, 1
        %v541 = vsel %vm466, %v538, %v540
        %v542 = vrot.slane %v415, 1
        %v543 = vrot.slane %v416, 1
        %v544 = vsel %vm466, %v542, %v543
        %v545 = vrot.slane %v417, 1
        %v546 = vsel %vm466, %v543, %v545
        %v579 = vadd.f32 %v334, %v469
        %v580 = vadd.f32 %v335, %v471
        %v581 = vadd.f32 %v336, %v474
        %v582 = vadd.f32 %v337, %v476
        %v583 = vadd.f32 %v338, %v479
        %v584 = vadd.f32 %v339, %v481
        %v585 = vadd.f32 %v340, %v484
        %v586 = vadd.f32 %v341, %v486
        %v587 = vadd.f32 %v342, %v489
        %v588 = vadd.f32 %v343, %v491
        %v589 = vadd.f32 %v344, %v494
        %v590 = vadd.f32 %v345, %v496
        %v591 = vadd.f32 %v346, %v499
        %v592 = vadd.f32 %v347, %v501
        %v593 = vadd.f32 %v348, %v504
        %v594 = vadd.f32 %v349, %v506
        %v595 = vadd.f32 %v350, %v509
        %v596 = vadd.f32 %v351, %v511
        %v597 = vadd.f32 %v352, %v514
        %v598 = vadd.f32 %v353, %v516
        %v599 = vadd.f32 %v354, %v519
        %v600 = vadd.f32 %v355, %v521
        %v601 = vadd.f32 %v356, %v524
        %v602 = vadd.f32 %v357, %v526
        %v603 = vadd.f32 %v358, %v529
        %v604 = vadd.f32 %v359, %v531
        %v605 = vadd.f32 %v360, %v534
        %v606 = vadd.f32 %v361, %v536
        %v607 = vadd.f32 %v362, %v539
        %v608 = vadd.f32 %v363, %v541
        %v609 = vadd.f32 %v364, %v544
        %v610 = vadd.f32 %v365, %v546
        %v611 = vlaneseq
        %v612 = vshrl.u32 %v611, 7
        %v613 = vsub.s32 2, %v612
        %v614 = vrot.slane %v295, %v613
        %v615 = vmul.f32 %v241, %v614
        %v616 = vmul.f32 %v242, %v614
        %v617 = vmul.f32 %v243, %v614
        %v618 = vmul.f32 %v244, %v614
        %v619 = vmul.f32 %v245, %v614
        %v620 = vmul.f32 %v246, %v614
        %v621 = vmul.f32 %v247, %v614
        %v622 = vmul.f32 %v248, %v614
        %v623 = vmul.f32 %v249, %v614
        %v624 = vmul.f32 %v250, %v614
        %v625 = vmul.f32 %v251, %v614
        %v626 = vmul.f32 %v252, %v614
        %v627 = vmul.f32 %v253, %v614
        %v628 = vmul.f32 %v254, %v614
        %v629 = vmul.f32 %v255, %v614
        %v630 = vmul.f32 %v256, %v614
        %v631 = vmul.f32 %v257, %v614
        %v632 = vmul.f32 %v258, %v614
        %v633 = vmul.f32 %v259, %v614
        %v634 = vmul.f32 %v260, %v614
        %v635 = vmul.f32 %v261, %v614
        %v636 = vmul.f32 %v262, %v614
        %v637 = vmul.f32 %v263, %v614
        %v638 = vmul.f32 %v264, %v614
        %v639 = vmul.f32 %v265, %v614
        %v640 = vmul.f32 %v266, %v614
        %v641 = vmul.f32 %v267, %v614
        %v642 = vmul.f32 %v268, %v614
        %v643 = vmul.f32 %v269, %v614
        %v644 = vmul.f32 %v270, %v614
        %v645 = vmul.f32 %v271, %v614
        %v646 = vmul.f32 %v272, %v614
        %v647 = vmul.f32 %v273, %v614
        %v648 = vmul.f32 %v274, %v614
        %v649 = vmul.f32 %v275, %v614
        %v650 = vmul.f32 %v276, %v614
        %v651 = vmul.f32 %v277, %v614
        %v652 = vmul.f32 %v278, %v614
        %v653 = vmul.f32 %v279, %v614
        %v654 = vmul.f32 %v280, %v614
        %v655 = vmul.f32 %v281, %v614
        %v656 = vmul.f32 %v282, %v614
        %v657 = vmul.f32 %v283, %v614
        %v658 = vmul.f32 %v284, %v614
        %v659 = vmul.f32 %v285, %v614
        %v660 = vmul.f32 %v286, %v614
        %v661 = vmul.f32 %v287, %v614
        %v662 = vmul.f32 %v288, %v614
        %vm711 = vcmask 1045504
        %v712 = vrot.slane %v615, 2
        %v713 = vrot.slane %v616, 2
        %v714 = vsel %vm711, %v712, %v713
        %v715 = vrot.slane %v617, 2
        %v716 = vsel %vm711, %v713, %v715
        %v717 = vrot.slane %v618, 2
        %v718 = vrot.slane %v619, 2
        %v719 = vsel %vm711, %v717, %v718
        %v720 = vrot.slane %v620, 2
        %v721 = vsel %vm711, %v718, %v720
        %v722 = vrot.slane %v621, 2
        %v723 = vrot.slane %v622, 2
        %v724 = vsel %vm711, %v722, %v723
        %v725 = vrot.slane %v623, 2
        %v726 = vsel %vm711, %v723, %v725
        %v727 = vrot.slane %v624, 2
        %v728 = vrot.slane %v625, 2
        %v729 = vsel %vm711, %v727, %v728
        %v730 = vrot.slane %v626, 2
        %v731 = vsel %vm711, %v728, %v730
        %v732 = vrot.slane %v627, 2
        %v733 = vrot.slane %v628, 2
        %v734 = vsel %vm711, %v732, %v733
        %v735 = vrot.slane %v629, 2
        %v736 = vsel %vm711, %v733, %v735
        %v737 = vrot.slane %v630, 2
        %v738 = vrot.slane %v631, 2
        %v739 = vsel %vm711, %v737, %v738
        %v740 = vrot.slane %v632, 2
        %v741 = vsel %vm711, %v738, %v740
        %v742 = vrot.slane %v633, 2
        %v743 = vrot.slane %v634, 2
        %v744 = vsel %vm711, %v742, %v743
        %v745 = vrot.slane %v635, 2
        %v746 = vsel %vm711, %v743, %v745
        %v747 = vrot.slane %v636, 2
        %v748 = vrot.slane %v637, 2
        %v749 = vsel %vm711, %v747, %v748
        %v750 = vrot.slane %v638, 2
        %v751 = vsel %vm711, %v748, %v750
        %v752 = vrot.slane %v639, 2
        %v753 = vrot.slane %v640, 2
        %v754 = vsel %vm711, %v752, %v753
        %v755 = vrot.slane %v641, 2
        %v756 = vsel %vm711, %v753, %v755
        %v757 = vrot.slane %v642, 2
        %v758 = vrot.slane %v643, 2
        %v759 = vsel %vm711, %v757, %v758
        %v760 = vrot.slane %v644, 2
        %v761 = vsel %vm711, %v758, %v760
        %v762 = vrot.slane %v645, 2
        %v763 = vrot.slane %v646, 2
        %v764 = vsel %vm711, %v762, %v763
        %v765 = vrot.slane %v647, 2
        %v766 = vsel %vm711, %v763, %v765
        %v767 = vrot.slane %v648, 2
        %v768 = vrot.slane %v649, 2
        %v769 = vsel %vm711, %v767, %v768
        %v770 = vrot.slane %v650, 2
        %v771 = vsel %vm711, %v768, %v770
        %v772 = vrot.slane %v651, 2
        %v773 = vrot.slane %v652, 2
        %v774 = vsel %vm711, %v772, %v773
        %v775 = vrot.slane %v653, 2
        %v776 = vsel %vm711, %v773, %v775
        %v777 = vrot.slane %v654, 2
        %v778 = vrot.slane %v655, 2
        %v779 = vsel %vm711, %v777, %v778
        %v780 = vrot.slane %v656, 2
        %v781 = vsel %vm711, %v778, %v780
        %v782 = vrot.slane %v657, 2
        %v783 = vrot.slane %v658, 2
        %v784 = vsel %vm711, %v782, %v783
        %v785 = vrot.slane %v659, 2
        %v786 = vsel %vm711, %v783, %v785
        %v787 = vrot.slane %v660, 2
        %v788 = vrot.slane %v661, 2
        %v789 = vsel %vm711, %v787, %v788
        %v790 = vrot.slane %v662, 2
        %v791 = vsel %vm711, %v788, %v790
        %v824 = vadd.f32 %v579, %v714
        %v825 = vadd.f32 %v580, %v716
        %v826 = vadd.f32 %v581, %v719
        %v827 = vadd.f32 %v582, %v721
        %v828 = vadd.f32 %v583, %v724
        %v829 = vadd.f32 %v584, %v726
        %v830 = vadd.f32 %v585, %v729
        %v831 = vadd.f32 %v586, %v731
        %v832 = vadd.f32 %v587, %v734
        %v833 = vadd.f32 %v588, %v736
        %v834 = vadd.f32 %v589, %v739
        %v835 = vadd.f32 %v590, %v741
        %v836 = vadd.f32 %v591, %v744
        %v837 = vadd.f32 %v592, %v746
        %v838 = vadd.f32 %v593, %v749
        %v839 = vadd.f32 %v594, %v751
        %v840 = vadd.f32 %v595, %v754
        %v841 = vadd.f32 %v596, %v756
        %v842 = vadd.f32 %v597, %v759
        %v843 = vadd.f32 %v598, %v761
        %v844 = vadd.f32 %v599, %v764
        %v845 = vadd.f32 %v600, %v766
        %v846 = vadd.f32 %v601, %v769
        %v847 = vadd.f32 %v602, %v771
        %v848 = vadd.f32 %v603, %v774
        %v849 = vadd.f32 %v604, %v776
        %v850 = vadd.f32 %v605, %v779
        %v851 = vadd.f32 %v606, %v781
        %v852 = vadd.f32 %v607, %v784
        %v853 = vadd.f32 %v608, %v786
        %v854 = vadd.f32 %v609, %v789
        %v855 = vadd.f32 %v610, %v791
        %v856 = vlaneseq
        %v857 = vshrl.u32 %v856, 7
        %v858 = vsub.s32 0, %v857
        %v859 = vrot.slane %v296, %v858
        %v860 = vmul.f32 %v244, %v859
        %v861 = vmul.f32 %v245, %v859
        %v862 = vmul.f32 %v247, %v859
        %v863 = vmul.f32 %v248, %v859
        %v864 = vmul.f32 %v250, %v859
        %v865 = vmul.f32 %v251, %v859
        %v866 = vmul.f32 %v253, %v859
        %v867 = vmul.f32 %v254, %v859
        %v868 = vmul.f32 %v256, %v859
        %v869 = vmul.f32 %v257, %v859
        %v870 = vmul.f32 %v259, %v859
        %v871 = vmul.f32 %v260, %v859
        %v872 = vmul.f32 %v262, %v859
        %v873 = vmul.f32 %v263, %v859
        %v874 = vmul.f32 %v265, %v859
        %v875 = vmul.f32 %v266, %v859
        %v876 = vmul.f32 %v268, %v859
        %v877 = vmul.f32 %v269, %v859
        %v878 = vmul.f32 %v271, %v859
        %v879 = vmul.f32 %v272, %v859
        %v880 = vmul.f32 %v274, %v859
        %v881 = vmul.f32 %v275, %v859
        %v882 = vmul.f32 %v277, %v859
        %v883 = vmul.f32 %v278, %v859
        %v884 = vmul.f32 %v280, %v859
        %v885 = vmul.f32 %v281, %v859
        %v886 = vmul.f32 %v283, %v859
        %v887 = vmul.f32 %v284, %v859
        %v888 = vmul.f32 %v286, %v859
        %v889 = vmul.f32 %v287, %v859
        %v890 = vmul.f32 %v289, %v859
        %v891 = vmul.f32 %v290, %v859
        %v892 = vadd.f32 %v824, %v860
        %v893 = vadd.f32 %v825, %v861
        %v894 = vadd.f32 %v826, %v862
        %v895 = vadd.f32 %v827, %v863
        %v896 = vadd.f32 %v828, %v864
        %v897 = vadd.f32 %v829, %v865
        %v898 = vadd.f32 %v830, %v866
        %v899 = vadd.f32 %v831, %v867
        %v900 = vadd.f32 %v832, %v868
        %v901 = vadd.f32 %v833, %v869
        %v902 = vadd.f32 %v834, %v870
        %v903 = vadd.f32 %v835, %v871
        %v904 = vadd.f32 %v836, %v872
        %v905 = vadd.f32 %v837, %v873
        %v906 = vadd.f32 %v838, %v874
        %v907 = vadd.f32 %v839, %v875
        %v908 = vadd.f32 %v840, %v876
        %v909 = vadd.f32 %v841, %v877
        %v910 = vadd.f32 %v842, %v878
        %v911 = vadd.f32 %v843, %v879
        %v912 = vadd.f32 %v844, %v880
        %v913 = vadd.f32 %v845, %v881
        %v914 = vadd.f32 %v846, %v882
        %v915 = vadd.f32 %v847, %v883
        %v916 = vadd.f32 %v848, %v884
        %v917 = vadd.f32 %v849, %v885
        %v918 = vadd.f32 %v850, %v886
        %v919 = vadd.f32 %v851, %v887
        %v920 = vadd.f32 %v852, %v888
        %v921 = vadd.f32 %v853, %v889
        %v922 = vadd.f32 %v854, %v890
        %v923 = vadd.f32 %v855, %v891
        %v924 = vlaneseq
        %v925 = vshrl.u32 %v924, 7
        %v926 = vsub.s32 1, %v925
        %v927 = vrot.slane %v296, %v926
        %v928 = vmul.f32 %v244, %v927
        %v929 = vmul.f32 %v245, %v927
        %v930 = vmul.f32 %v246, %v927
        %v931 = vmul.f32 %v247, %v927
        %v932 = vmul.f32 %v248, %v927
        %v933 = vmul.f32 %v249, %v927
        %v934 = vmul.f32 %v250, %v927
        %v935 = vmul.f32 %v251, %v927
        %v936 = vmul.f32 %v252, %v927
        %v937 = vmul.f32 %v253, %v927
        %v938 = vmul.f32 %v254, %v927
        %v939 = vmul.f32 %v255, %v927
        %v940 = vmul.f32 %v256, %v927
        %v941 = vmul.f32 %v257, %v927
        %v942 = vmul.f32 %v258, %v927
        %v943 = vmul.f32 %v259, %v927
        %v944 = vmul.f32 %v260, %v927
        %v945 = vmul.f32 %v261, %v927
        %v946 = vmul.f32 %v262, %v927
        %v947 = vmul.f32 %v263, %v927
        %v948 = vmul.f32 %v264, %v927
        %v949 = vmul.f32 %v265, %v927
        %v950 = vmul.f32 %v266, %v927
        %v951 = vmul.f32 %v267, %v927
        %v952 = vmul.f32 %v268, %v927
        %v953 = vmul.f32 %v269, %v927
        %v954 = vmul.f32 %v270, %v927
        %v955 = vmul.f32 %v271, %v927
        %v956 = vmul.f32 %v272, %v927
        %v957 = vmul.f32 %v273, %v927
        %v958 = vmul.f32 %v274, %v927
        %v959 = vmul.f32 %v275, %v927
        %v960 = vmul.f32 %v276, %v927
        %v961 = vmul.f32 %v277, %v927
        %v962 = vmul.f32 %v278, %v927
        %v963 = vmul.f32 %v279, %v927
        %v964 = vmul.f32 %v280, %v927
        %v965 = vmul.f32 %v281, %v927
        %v966 = vmul.f32 %v282, %v927
        %v967 = vmul.f32 %v283, %v927
        %v968 = vmul.f32 %v284, %v927
        %v969 = vmul.f32 %v285, %v927
        %v970 = vmul.f32 %v286, %v927
        %v971 = vmul.f32 %v287, %v927
        %v972 = vmul.f32 %v288, %v927
        %v973 = vmul.f32 %v289, %v927
        %v974 = vmul.f32 %v290, %v927
        %v975 = vmul.f32 %v291, %v927
        %v1024 = vrot.slane %v928, 1
        %v1025 = vrot.slane %v929, 1
        %v1026 = vsel %vm466, %v1024, %v1025
        %v1027 = vrot.slane %v930, 1
        %v1028 = vsel %vm466, %v1025, %v1027
        %v1029 = vrot.slane %v931, 1
        %v1030 = vrot.slane %v932, 1
        %v1031 = vsel %vm466, %v1029, %v1030
        %v1032 = vrot.slane %v933, 1
        %v1033 = vsel %vm466, %v1030, %v1032
        %v1034 = vrot.slane %v934, 1
        %v1035 = vrot.slane %v935, 1
        %v1036 = vsel %vm466, %v1034, %v1035
        %v1037 = vrot.slane %v936, 1
        %v1038 = vsel %vm466, %v1035, %v1037
        %v1039 = vrot.slane %v937, 1
        %v1040 = vrot.slane %v938, 1
        %v1041 = vsel %vm466, %v1039, %v1040
        %v1042 = vrot.slane %v939, 1
        %v1043 = vsel %vm466, %v1040, %v1042
        %v1044 = vrot.slane %v940, 1
        %v1045 = vrot.slane %v941, 1
        %v1046 = vsel %vm466, %v1044, %v1045
        %v1047 = vrot.slane %v942, 1
        %v1048 = vsel %vm466, %v1045, %v1047
        %v1049 = vrot.slane %v943, 1
        %v1050 = vrot.slane %v944, 1
        %v1051 = vsel %vm466, %v1049, %v1050
        %v1052 = vrot.slane %v945, 1
        %v1053 = vsel %vm466, %v1050, %v1052
        %v1054 = vrot.slane %v946, 1
        %v1055 = vrot.slane %v947, 1
        %v1056 = vsel %vm466, %v1054, %v1055
        %v1057 = vrot.slane %v948, 1
        %v1058 = vsel %vm466, %v1055, %v1057
        %v1059 = vrot.slane %v949, 1
        %v1060 = vrot.slane %v950, 1
        %v1061 = vsel %vm466, %v1059, %v1060
        %v1062 = vrot.slane %v951, 1
        %v1063 = vsel %vm466, %v1060, %v1062
        %v1064 = vrot.slane %v952, 1
        %v1065 = vrot.slane %v953, 1
        %v1066 = vsel %vm466, %v1064, %v1065
        %v1067 = vrot.slane %v954, 1
        %v1068 = vsel %vm466, %v1065, %v1067
        %v1069 = vrot.slane %v955, 1
        %v1070 = vrot.slane %v956, 1
        %v1071 = vsel %vm466, %v1069, %v1070
        %v1072 = vrot.slane %v957, 1
        %v1073 = vsel %vm466, %v1070, %v1072
        %v1074 = vrot.slane %v958, 1
        %v1075 = vrot.slane %v959, 1
        %v1076 = vsel %vm466, %v1074, %v1075
        %v1077 = vrot.slane %v960, 1
        %v1078 = vsel %vm466, %v1075, %v1077
        %v1079 = vrot.slane %v961, 1
        %v1080 = vrot.slane %v962, 1
        %v1081 = vsel %vm466, %v1079, %v1080
        %v1082 = vrot.slane %v963, 1
        %v1083 = vsel %vm466, %v1080, %v1082
        %v1084 = vrot.slane %v964, 1
        %v1085 = vrot.slane %v965, 1
        %v1086 = vsel %vm466, %v1084, %v1085
        %v1087 = vrot.slane %v966, 1
        %v1088 = vsel %vm466, %v1085, %v1087
        %v1089 = vrot.slane %v967, 1
        %v1090 = vrot.slane %v968, 1
        %v1091 = vsel %vm466, %v1089, %v1090
        %v1092 = vrot.slane %v969, 1
        %v1093 = vsel %vm466, %v1090, %v1092
        %v1094 = vrot.slane %v970, 1
        %v1095 = vrot.slane %v971, 1
        %v1096 = vsel %vm466, %v1094, %v1095
        %v1097 = vrot.slane %v972, 1
        %v1098 = vsel %vm466, %v1095, %v1097
        %v1099 = vrot.slane %v973, 1
        %v1100 = vrot.slane %v974, 1
        %v1101 = vsel %vm466, %v1099, %v1100
        %v1102 = vrot.slane %v975, 1
        %v1103 = vsel %vm466, %v1100, %v1102
        %v1136 = vadd.f32 %v892, %v1026
        %v1137 = vadd.f32 %v893, %v1028
        %v1138 = vadd.f32 %v894, %v1031
        %v1139 = vadd.f32 %v895, %v1033
        %v1140 = vadd.f32 %v896, %v1036
        %v1141 = vadd.f32 %v897, %v1038
        %v1142 = vadd.f32 %v898, %v1041
        %v1143 = vadd.f32 %v899, %v1043
        %v1144 = vadd.f32 %v900, %v1046
        %v1145 = vadd.f32 %v901, %v1048
        %v1146 = vadd.f32 %v902, %v1051
        %v1147 = vadd.f32 %v903, %v1053
        %v1148 = vadd.f32 %v904, %v1056
        %v1149 = vadd.f32 %v905, %v1058
        %v1150 = vadd.f32 %v906, %v1061
        %v1151 = vadd.f32 %v907, %v1063
        %v1152 = vadd.f32 %v908, %v1066
        %v1153 = vadd.f32 %v909, %v1068
        %v1154 = vadd.f32 %v910, %v1071
        %v1155 = vadd.f32 %v911, %v1073
        %v1156 = vadd.f32 %v912, %v1076
        %v1157 = vadd.f32 %v913, %v1078
        %v1158 = vadd.f32 %v914, %v1081
        %v1159 = vadd.f32 %v915, %v1083
        %v1160 = vadd.f32 %v916, %v1086
        %v1161 = vadd.f32 %v917, %v1088
        %v1162 = vadd.f32 %v918, %v1091
        %v1163 = vadd.f32 %v919, %v1093
        %v1164 = vadd.f32 %v920, %v1096
        %v1165 = vadd.f32 %v921, %v1098
        %v1166 = vadd.f32 %v922, %v1101
        %v1167 = vadd.f32 %v923, %v1103
        %v1168 = vlaneseq
        %v1169 = vshrl.u32 %v1168, 7
        %v1170 = vsub.s32 2, %v1169
        %v1171 = vrot.slane %v296, %v1170
        %v1172 = vmul.f32 %v244, %v1171
        %v1173 = vmul.f32 %v245, %v1171
        %v1174 = vmul.f32 %v246, %v1171
        %v1175 = vmul.f32 %v247, %v1171
        %v1176 = vmul.f32 %v248, %v1171
        %v1177 = vmul.f32 %v249, %v1171
        %v1178 = vmul.f32 %v250, %v1171
        %v1179 = vmul.f32 %v251, %v1171
        %v1180 = vmul.f32 %v252, %v1171
        %v1181 = vmul.f32 %v253, %v1171
        %v1182 = vmul.f32 %v254, %v1171
        %v1183 = vmul.f32 %v255, %v1171
        %v1184 = vmul.f32 %v256, %v1171
        %v1185 = vmul.f32 %v257, %v1171
        %v1186 = vmul.f32 %v258, %v1171
        %v1187 = vmul.f32 %v259, %v1171
        %v1188 = vmul.f32 %v260, %v1171
        %v1189 = vmul.f32 %v261, %v1171
        %v1190 = vmul.f32 %v262, %v1171
        %v1191 = vmul.f32 %v263, %v1171
        %v1192 = vmul.f32 %v264, %v1171
        %v1193 = vmul.f32 %v265, %v1171
        %v1194 = vmul.f32 %v266, %v1171
        %v1195 = vmul.f32 %v267, %v1171
        %v1196 = vmul.f32 %v268, %v1171
        %v1197 = vmul.f32 %v269, %v1171
        %v1198 = vmul.f32 %v270, %v1171
        %v1199 = vmul.f32 %v271, %v1171
        %v1200 = vmul.f32 %v272, %v1171
        %v1201 = vmul.f32 %v273, %v1171
        %v1202 = vmul.f32 %v274, %v1171
        %v1203 = vmul.f32 %v275, %v1171
        %v1204 = vmul.f32 %v276, %v1171
        %v1205 = vmul.f32 %v277, %v1171
        %v1206 = vmul.f32 %v278, %v1171
        %v1207 = vmul.f32 %v279, %v1171
        %v1208 = vmul.f32 %v280, %v1171
        %v1209 = vmul.f32 %v281, %v1171
        %v1210 = vmul.f32 %v282, %v1171
        %v1211 = vmul.f32 %v283, %v1171
        %v1212 = vmul.f32 %v284, %v1171
        %v1213 = vmul.f32 %v285, %v1171
        %v1214 = vmul.f32 %v286, %v1171
        %v1215 = vmul.f32 %v287, %v1171
        %v1216 = vmul.f32 %v288, %v1171
        %v1217 = vmul.f32 %v289, %v1171
        %v1218 = vmul.f32 %v290, %v1171
        %v1219 = vmul.f32 %v291, %v1171
        %v1268 = vrot.slane %v1172, 2
        %v1269 = vrot.slane %v1173, 2
        %v1270 = vsel %vm711, %v1268, %v1269
        %v1271 = vrot.slane %v1174, 2
        %v1272 = vsel %vm711, %v1269, %v1271
        %v1273 = vrot.slane %v1175, 2
        %v1274 = vrot.slane %v1176, 2
        %v1275 = vsel %vm711, %v1273, %v1274
        %v1276 = vrot.slane %v1177, 2
        %v1277 = vsel %vm711, %v1274, %v1276
        %v1278 = vrot.slane %v1178, 2
        %v1279 = vrot.slane %v1179, 2
        %v1280 = vsel %vm711, %v1278, %v1279
        %v1281 = vrot.slane %v1180, 2
        %v1282 = vsel %vm711, %v1279, %v1281
        %v1283 = vrot.slane %v1181, 2
        %v1284 = vrot.slane %v1182, 2
        %v1285 = vsel %vm711, %v1283, %v1284
        %v1286 = vrot.slane %v1183, 2
        %v1287 = vsel %vm711, %v1284, %v1286
        %v1288 = vrot.slane %v1184, 2
        %v1289 = vrot.slane %v1185, 2
        %v1290 = vsel %vm711, %v1288, %v1289
        %v1291 = vrot.slane %v1186, 2
        %v1292 = vsel %vm711, %v1289, %v1291
        %v1293 = vrot.slane %v1187, 2
        %v1294 = vrot.slane %v1188, 2
        %v1295 = vsel %vm711, %v1293, %v1294
        %v1296 = vrot.slane %v1189, 2
        %v1297 = vsel %vm711, %v1294, %v1296
        %v1298 = vrot.slane %v1190, 2
        %v1299 = vrot.slane %v1191, 2
        %v1300 = vsel %vm711, %v1298, %v1299
        %v1301 = vrot.slane %v1192, 2
        %v1302 = vsel %vm711, %v1299, %v1301
        %v1303 = vrot.slane %v1193, 2
        %v1304 = vrot.slane %v1194, 2
        %v1305 = vsel %vm711, %v1303, %v1304
        %v1306 = vrot.slane %v1195, 2
        %v1307 = vsel %vm711, %v1304, %v1306
        %v1308 = vrot.slane %v1196, 2
        %v1309 = vrot.slane %v1197, 2
        %v1310 = vsel %vm711, %v1308, %v1309
        %v1311 = vrot.slane %v1198, 2
        %v1312 = vsel %vm711, %v1309, %v1311
        %v1313 = vrot.slane %v1199, 2
        %v1314 = vrot.slane %v1200, 2
        %v1315 = vsel %vm711, %v1313, %v1314
        %v1316 = vrot.slane %v1201, 2
        %v1317 = vsel %vm711, %v1314, %v1316
        %v1318 = vrot.slane %v1202, 2
        %v1319 = vrot.slane %v1203, 2
        %v1320 = vsel %vm711, %v1318, %v1319
        %v1321 = vrot.slane %v1204, 2
        %v1322 = vsel %vm711, %v1319, %v1321
        %v1323 = vrot.slane %v1205, 2
        %v1324 = vrot.slane %v1206, 2
        %v1325 = vsel %vm711, %v1323, %v1324
        %v1326 = vrot.slane %v1207, 2
        %v1327 = vsel %vm711, %v1324, %v1326
        %v1328 = vrot.slane %v1208, 2
        %v1329 = vrot.slane %v1209, 2
        %v1330 = vsel %vm711, %v1328, %v1329
        %v1331 = vrot.slane %v1210, 2
        %v1332 = vsel %vm711, %v1329, %v1331
        %v1333 = vrot.slane %v1211, 2
        %v1334 = vrot.slane %v1212, 2
        %v1335 = vsel %vm711, %v1333, %v1334
        %v1336 = vrot.slane %v1213, 2
        %v1337 = vsel %vm711, %v1334, %v1336
        %v1338 = vrot.slane %v1214, 2
        %v1339 = vrot.slane %v1215, 2
        %v1340 = vsel %vm711, %v1338, %v1339
        %v1341 = vrot.slane %v1216, 2
        %v1342 = vsel %vm711, %v1339, %v1341
        %v1343 = vrot.slane %v1217, 2
        %v1344 = vrot.slane %v1218, 2
        %v1345 = vsel %vm711, %v1343, %v1344
        %v1346 = vrot.slane %v1219, 2
        %v1347 = vsel %vm711, %v1344, %v1346
        %v1380 = vadd.f32 %v1136, %v1270
        %v1381 = vadd.f32 %v1137, %v1272
        %v1382 = vadd.f32 %v1138, %v1275
        %v1383 = vadd.f32 %v1139, %v1277
        %v1384 = vadd.f32 %v1140, %v1280
        %v1385 = vadd.f32 %v1141, %v1282
        %v1386 = vadd.f32 %v1142, %v1285
        %v1387 = vadd.f32 %v1143, %v1287
        %v1388 = vadd.f32 %v1144, %v1290
        %v1389 = vadd.f32 %v1145, %v1292
        %v1390 = vadd.f32 %v1146, %v1295
        %v1391 = vadd.f32 %v1147, %v1297
        %v1392 = vadd.f32 %v1148, %v1300
        %v1393 = vadd.f32 %v1149, %v1302
        %v1394 = vadd.f32 %v1150, %v1305
        %v1395 = vadd.f32 %v1151, %v1307
        %v1396 = vadd.f32 %v1152, %v1310
        %v1397 = vadd.f32 %v1153, %v1312
        %v1398 = vadd.f32 %v1154, %v1315
        %v1399 = vadd.f32 %v1155, %v1317
        %v1400 = vadd.f32 %v1156, %v1320
        %v1401 = vadd.f32 %v1157, %v1322
        %v1402 = vadd.f32 %v1158, %v1325
        %v1403 = vadd.f32 %v1159, %v1327
        %v1404 = vadd.f32 %v1160, %v1330
        %v1405 = vadd.f32 %v1161, %v1332
        %v1406 = vadd.f32 %v1162, %v1335
        %v1407 = vadd.f32 %v1163, %v1337
        %v1408 = vadd.f32 %v1164, %v1340
        %v1409 = vadd.f32 %v1165, %v1342
        %v1410 = vadd.f32 %v1166, %v1345
        %v1411 = vadd.f32 %v1167, %v1347
        %v1412 = vlaneseq
        %v1413 = vshrl.u32 %v1412, 7
        %v1414 = vsub.s32 0, %v1413
        %v1415 = vrot.slane %v297, %v1414
        %v1416 = vmul.f32 %v247, %v1415
        %v1417 = vmul.f32 %v248, %v1415
        %v1418 = vmul.f32 %v250, %v1415
        %v1419 = vmul.f32 %v251, %v1415
        %v1420 = vmul.f32 %v253, %v1415
        %v1421 = vmul.f32 %v254, %v1415
        %v1422 = vmul.f32 %v256, %v1415
        %v1423 = vmul.f32 %v257, %v1415
        %v1424 = vmul.f32 %v259, %v1415
        %v1425 = vmul.f32 %v260, %v1415
        %v1426 = vmul.f32 %v262, %v1415
        %v1427 = vmul.f32 %v263, %v1415
        %v1428 = vmul.f32 %v265, %v1415
        %v1429 = vmul.f32 %v266, %v1415
        %v1430 = vmul.f32 %v268, %v1415
        %v1431 = vmul.f32 %v269, %v1415
        %v1432 = vmul.f32 %v271, %v1415
        %v1433 = vmul.f32 %v272, %v1415
        %v1434 = vmul.f32 %v274, %v1415
        %v1435 = vmul.f32 %v275, %v1415
        %v1436 = vmul.f32 %v277, %v1415
        %v1437 = vmul.f32 %v278, %v1415
        %v1438 = vmul.f32 %v280, %v1415
        %v1439 = vmul.f32 %v281, %v1415
        %v1440 = vmul.f32 %v283, %v1415
        %v1441 = vmul.f32 %v284, %v1415
        %v1442 = vmul.f32 %v286, %v1415
        %v1443 = vmul.f32 %v287, %v1415
        %v1444 = vmul.f32 %v289, %v1415
        %v1445 = vmul.f32 %v290, %v1415
        %v1446 = vmul.f32 %v292, %v1415
        %v1447 = vmul.f32 %v293, %v1415
        %v1448 = vadd.f32 %v1380, %v1416
        %v1449 = vadd.f32 %v1381, %v1417
        %v1450 = vadd.f32 %v1382, %v1418
        %v1451 = vadd.f32 %v1383, %v1419
        %v1452 = vadd.f32 %v1384, %v1420
        %v1453 = vadd.f32 %v1385, %v1421
        %v1454 = vadd.f32 %v1386, %v1422
        %v1455 = vadd.f32 %v1387, %v1423
        %v1456 = vadd.f32 %v1388, %v1424
        %v1457 = vadd.f32 %v1389, %v1425
        %v1458 = vadd.f32 %v1390, %v1426
        %v1459 = vadd.f32 %v1391, %v1427
        %v1460 = vadd.f32 %v1392, %v1428
        %v1461 = vadd.f32 %v1393, %v1429
        %v1462 = vadd.f32 %v1394, %v1430
        %v1463 = vadd.f32 %v1395, %v1431
        %v1464 = vadd.f32 %v1396, %v1432
        %v1465 = vadd.f32 %v1397, %v1433
        %v1466 = vadd.f32 %v1398, %v1434
        %v1467 = vadd.f32 %v1399, %v1435
        %v1468 = vadd.f32 %v1400, %v1436
        %v1469 = vadd.f32 %v1401, %v1437
        %v1470 = vadd.f32 %v1402, %v1438
        %v1471 = vadd.f32 %v1403, %v1439
        %v1472 = vadd.f32 %v1404, %v1440
        %v1473 = vadd.f32 %v1405, %v1441
        %v1474 = vadd.f32 %v1406, %v1442
        %v1475 = vadd.f32 %v1407, %v1443
        %v1476 = vadd.f32 %v1408, %v1444
        %v1477 = vadd.f32 %v1409, %v1445
        %v1478 = vadd.f32 %v1410, %v1446
        %v1479 = vadd.f32 %v1411, %v1447
        %v1480 = vlaneseq
        %v1481 = vshrl.u32 %v1480, 7
        %v1482 = vsub.s32 1, %v1481
        %v1483 = vrot.slane %v297, %v1482
        %v1484 = vmul.f32 %v247, %v1483
        %v1485 = vmul.f32 %v248, %v1483
        %v1486 = vmul.f32 %v249, %v1483
        %v1487 = vmul.f32 %v250, %v1483
        %v1488 = vmul.f32 %v251, %v1483
        %v1489 = vmul.f32 %v252, %v1483
        %v1490 = vmul.f32 %v253, %v1483
        %v1491 = vmul.f32 %v254, %v1483
        %v1492 = vmul.f32 %v255, %v1483
        %v1493 = vmul.f32 %v256, %v1483
        %v1494 = vmul.f32 %v257, %v1483
        %v1495 = vmul.f32 %v258, %v1483
        %v1496 = vmul.f32 %v259, %v1483
        %v1497 = vmul.f32 %v260, %v1483
        %v1498 = vmul.f32 %v261, %v1483
        %v1499 = vmul.f32 %v262, %v1483
        %v1500 = vmul.f32 %v263, %v1483
        %v1501 = vmul.f32 %v264, %v1483
        %v1502 = vmul.f32 %v265, %v1483
        %v1503 = vmul.f32 %v266, %v1483
        %v1504 = vmul.f32 %v267, %v1483
        %v1505 = vmul.f32 %v268, %v1483
        %v1506 = vmul.f32 %v269, %v1483
        %v1507 = vmul.f32 %v270, %v1483
        %v1508 = vmul.f32 %v271, %v1483
        %v1509 = vmul.f32 %v272, %v1483
        %v1510 = vmul.f32 %v273, %v1483
        %v1511 = vmul.f32 %v274, %v1483
        %v1512 = vmul.f32 %v275, %v1483
        %v1513 = vmul.f32 %v276, %v1483
        %v1514 = vmul.f32 %v277, %v1483
        %v1515 = vmul.f32 %v278, %v1483
        %v1516 = vmul.f32 %v279, %v1483
        %v1517 = vmul.f32 %v280, %v1483
        %v1518 = vmul.f32 %v281, %v1483
        %v1519 = vmul.f32 %v282, %v1483
        %v1520 = vmul.f32 %v283, %v1483
        %v1521 = vmul.f32 %v284, %v1483
        %v1522 = vmul.f32 %v285, %v1483
        %v1523 = vmul.f32 %v286, %v1483
        %v1524 = vmul.f32 %v287, %v1483
        %v1525 = vmul.f32 %v288, %v1483
        %v1526 = vmul.f32 %v289, %v1483
        %v1527 = vmul.f32 %v290, %v1483
        %v1528 = vmul.f32 %v291, %v1483
        %v1529 = vmul.f32 %v292, %v1483
        %v1530 = vmul.f32 %v293, %v1483
        %v1531 = vmul.f32 %v294, %v1483
        %v1580 = vrot.slane %v1484, 1
        %v1581 = vrot.slane %v1485, 1
        %v1582 = vsel %vm466, %v1580, %v1581
        %v1583 = vrot.slane %v1486, 1
        %v1584 = vsel %vm466, %v1581, %v1583
        %v1585 = vrot.slane %v1487, 1
        %v1586 = vrot.slane %v1488, 1
        %v1587 = vsel %vm466, %v1585, %v1586
        %v1588 = vrot.slane %v1489, 1
        %v1589 = vsel %vm466, %v1586, %v1588
        %v1590 = vrot.slane %v1490, 1
        %v1591 = vrot.slane %v1491, 1
        %v1592 = vsel %vm466, %v1590, %v1591
        %v1593 = vrot.slane %v1492, 1
        %v1594 = vsel %vm466, %v1591, %v1593
        %v1595 = vrot.slane %v1493, 1
        %v1596 = vrot.slane %v1494, 1
        %v1597 = vsel %vm466, %v1595, %v1596
        %v1598 = vrot.slane %v1495, 1
        %v1599 = vsel %vm466, %v1596, %v1598
        %v1600 = vrot.slane %v1496, 1
        %v1601 = vrot.slane %v1497, 1
        %v1602 = vsel %vm466, %v1600, %v1601
        %v1603 = vrot.slane %v1498, 1
        %v1604 = vsel %vm466, %v1601, %v1603
        %v1605 = vrot.slane %v1499, 1
        %v1606 = vrot.slane %v1500, 1
        %v1607 = vsel %vm466, %v1605, %v1606
        %v1608 = vrot.slane %v1501, 1
        %v1609 = vsel %vm466, %v1606, %v1608
        %v1610 = vrot.slane %v1502, 1
        %v1611 = vrot.slane %v1503, 1
        %v1612 = vsel %vm466, %v1610, %v1611
        %v1613 = vrot.slane %v1504, 1
        %v1614 = vsel %vm466, %v1611, %v1613
        %v1615 = vrot.slane %v1505, 1
        %v1616 = vrot.slane %v1506, 1
        %v1617 = vsel %vm466, %v1615, %v1616
        %v1618 = vrot.slane %v1507, 1
        %v1619 = vsel %vm466, %v1616, %v1618
        %v1620 = vrot.slane %v1508, 1
        %v1621 = vrot.slane %v1509, 1
        %v1622 = vsel %vm466, %v1620, %v1621
        %v1623 = vrot.slane %v1510, 1
        %v1624 = vsel %vm466, %v1621, %v1623
        %v1625 = vrot.slane %v1511, 1
        %v1626 = vrot.slane %v1512, 1
        %v1627 = vsel %vm466, %v1625, %v1626
        %v1628 = vrot.slane %v1513, 1
        %v1629 = vsel %vm466, %v1626, %v1628
        %v1630 = vrot.slane %v1514, 1
        %v1631 = vrot.slane %v1515, 1
        %v1632 = vsel %vm466, %v1630, %v1631
        %v1633 = vrot.slane %v1516, 1
        %v1634 = vsel %vm466, %v1631, %v1633
        %v1635 = vrot.slane %v1517, 1
        %v1636 = vrot.slane %v1518, 1
        %v1637 = vsel %vm466, %v1635, %v1636
        %v1638 = vrot.slane %v1519, 1
        %v1639 = vsel %vm466, %v1636, %v1638
        %v1640 = vrot.slane %v1520, 1
        %v1641 = vrot.slane %v1521, 1
        %v1642 = vsel %vm466, %v1640, %v1641
        %v1643 = vrot.slane %v1522, 1
        %v1644 = vsel %vm466, %v1641, %v1643
        %v1645 = vrot.slane %v1523, 1
        %v1646 = vrot.slane %v1524, 1
        %v1647 = vsel %vm466, %v1645, %v1646
        %v1648 = vrot.slane %v1525, 1
        %v1649 = vsel %vm466, %v1646, %v1648
        %v1650 = vrot.slane %v1526, 1
        %v1651 = vrot.slane %v1527, 1
        %v1652 = vsel %vm466, %v1650, %v1651
        %v1653 = vrot.slane %v1528, 1
        %v1654 = vsel %vm466, %v1651, %v1653
        %v1655 = vrot.slane %v1529, 1
        %v1656 = vrot.slane %v1530, 1
        %v1657 = vsel %vm466, %v1655, %v1656
        %v1658 = vrot.slane %v1531, 1
        %v1659 = vsel %vm466, %v1656, %v1658
        %v1692 = vadd.f32 %v1448, %v1582
        %v1693 = vadd.f32 %v1449, %v1584
        %v1694 = vadd.f32 %v1450, %v1587
        %v1695 = vadd.f32 %v1451, %v1589
        %v1696 = vadd.f32 %v1452, %v1592
        %v1697 = vadd.f32 %v1453, %v1594
        %v1698 = vadd.f32 %v1454, %v1597
        %v1699 = vadd.f32 %v1455, %v1599
        %v1700 = vadd.f32 %v1456, %v1602
        %v1701 = vadd.f32 %v1457, %v1604
        %v1702 = vadd.f32 %v1458, %v1607
        %v1703 = vadd.f32 %v1459, %v1609
        %v1704 = vadd.f32 %v1460, %v1612
        %v1705 = vadd.f32 %v1461, %v1614
        %v1706 = vadd.f32 %v1462, %v1617
        %v1707 = vadd.f32 %v1463, %v1619
        %v1708 = vadd.f32 %v1464, %v1622
        %v1709 = vadd.f32 %v1465, %v1624
        %v1710 = vadd.f32 %v1466, %v1627
        %v1711 = vadd.f32 %v1467, %v1629
        %v1712 = vadd.f32 %v1468, %v1632
        %v1713 = vadd.f32 %v1469, %v1634
        %v1714 = vadd.f32 %v1470, %v1637
        %v1715 = vadd.f32 %v1471, %v1639
        %v1716 = vadd.f32 %v1472, %v1642
        %v1717 = vadd.f32 %v1473, %v1644
        %v1718 = vadd.f32 %v1474, %v1647
        %v1719 = vadd.f32 %v1475, %v1649
        %v1720 = vadd.f32 %v1476, %v1652
        %v1721 = vadd.f32 %v1477, %v1654
        %v1722 = vadd.f32 %v1478, %v1657
        %v1723 = vadd.f32 %v1479, %v1659
        %v1724 = vlaneseq
        %v1725 = vshrl.u32 %v1724, 7
        %v1726 = vsub.s32 2, %v1725
        %v1727 = vrot.slane %v297, %v1726
        %v1728 = vmul.f32 %v247, %v1727
        %v1729 = vmul.f32 %v248, %v1727
        %v1730 = vmul.f32 %v249, %v1727
        %v1731 = vmul.f32 %v250, %v1727
        %v1732 = vmul.f32 %v251, %v1727
        %v1733 = vmul.f32 %v252, %v1727
        %v1734 = vmul.f32 %v253, %v1727
        %v1735 = vmul.f32 %v254, %v1727
        %v1736 = vmul.f32 %v255, %v1727
        %v1737 = vmul.f32 %v256, %v1727
        %v1738 = vmul.f32 %v257, %v1727
        %v1739 = vmul.f32 %v258, %v1727
        %v1740 = vmul.f32 %v259, %v1727
        %v1741 = vmul.f32 %v260, %v1727
        %v1742 = vmul.f32 %v261, %v1727
        %v1743 = vmul.f32 %v262, %v1727
        %v1744 = vmul.f32 %v263, %v1727
        %v1745 = vmul.f32 %v264, %v1727
        %v1746 = vmul.f32 %v265, %v1727
        %v1747 = vmul.f32 %v266, %v1727
        %v1748 = vmul.f32 %v267, %v1727
        %v1749 = vmul.f32 %v268, %v1727
        %v1750 = vmul.f32 %v269, %v1727
        %v1751 = vmul.f32 %v270, %v1727
        %v1752 = vmul.f32 %v271, %v1727
        %v1753 = vmul.f32 %v272, %v1727
        %v1754 = vmul.f32 %v273, %v1727
        %v1755 = vmul.f32 %v274, %v1727
        %v1756 = vmul.f32 %v275, %v1727
        %v1757 = vmul.f32 %v276, %v1727
        %v1758 = vmul.f32 %v277, %v1727
        %v1759 = vmul.f32 %v278, %v1727
        %v1760 = vmul.f32 %v279, %v1727
        %v1761 = vmul.f32 %v280, %v1727
        %v1762 = vmul.f32 %v281, %v1727
        %v1763 = vmul.f32 %v282, %v1727
        %v1764 = vmul.f32 %v283, %v1727
        %v1765 = vmul.f32 %v284, %v1727
        %v1766 = vmul.f32 %v285, %v1727
        %v1767 = vmul.f32 %v286, %v1727
        %v1768 = vmul.f32 %v287, %v1727
        %v1769 = vmul.f32 %v288, %v1727
        %v1770 = vmul.f32 %v289, %v1727
        %v1771 = vmul.f32 %v290, %v1727
        %v1772 = vmul.f32 %v291, %v1727
        %v1773 = vmul.f32 %v292, %v1727
        %v1774 = vmul.f32 %v293, %v1727
        %v1775 = vmul.f32 %v294, %v1727
        %v1824 = vrot.slane %v1728, 2
        %v1825 = vrot.slane %v1729, 2
        %v1826 = vsel %vm711, %v1824, %v1825
        %v1827 = vrot.slane %v1730, 2
        %v1828 = vsel %vm711, %v1825, %v1827
        %v1829 = vrot.slane %v1731, 2
        %v1830 = vrot.slane %v1732, 2
        %v1831 = vsel %vm711, %v1829, %v1830
        %v1832 = vrot.slane %v1733, 2
        %v1833 = vsel %vm711, %v1830, %v1832
        %v1834 = vrot.slane %v1734, 2
        %v1835 = vrot.slane %v1735, 2
        %v1836 = vsel %vm711, %v1834, %v1835
        %v1837 = vrot.slane %v1736, 2
        %v1838 = vsel %vm711, %v1835, %v1837
        %v1839 = vrot.slane %v1737, 2
        %v1840 = vrot.slane %v1738, 2
        %v1841 = vsel %vm711, %v1839, %v1840
        %v1842 = vrot.slane %v1739, 2
        %v1843 = vsel %vm711, %v1840, %v1842
        %v1844 = vrot.slane %v1740, 2
        %v1845 = vrot.slane %v1741, 2
        %v1846 = vsel %vm711, %v1844, %v1845
        %v1847 = vrot.slane %v1742, 2
        %v1848 = vsel %vm711, %v1845, %v1847
        %v1849 = vrot.slane %v1743, 2
        %v1850 = vrot.slane %v1744, 2
        %v1851 = vsel %vm711, %v1849, %v1850
        %v1852 = vrot.slane %v1745, 2
        %v1853 = vsel %vm711, %v1850, %v1852
        %v1854 = vrot.slane %v1746, 2
        %v1855 = vrot.slane %v1747, 2
        %v1856 = vsel %vm711, %v1854, %v1855
        %v1857 = vrot.slane %v1748, 2
        %v1858 = vsel %vm711, %v1855, %v1857
        %v1859 = vrot.slane %v1749, 2
        %v1860 = vrot.slane %v1750, 2
        %v1861 = vsel %vm711, %v1859, %v1860
        %v1862 = vrot.slane %v1751, 2
        %v1863 = vsel %vm711, %v1860, %v1862
        %v1864 = vrot.slane %v1752, 2
        %v1865 = vrot.slane %v1753, 2
        %v1866 = vsel %vm711, %v1864, %v1865
        %v1867 = vrot.slane %v1754, 2
        %v1868 = vsel %vm711, %v1865, %v1867
        %v1869 = vrot.slane %v1755, 2
        %v1870 = vrot.slane %v1756, 2
        %v1871 = vsel %vm711, %v1869, %v1870
        %v1872 = vrot.slane %v1757, 2
        %v1873 = vsel %vm711, %v1870, %v1872
        %v1874 = vrot.slane %v1758, 2
        %v1875 = vrot.slane %v1759, 2
        %v1876 = vsel %vm711, %v1874, %v1875
        %v1877 = vrot.slane %v1760, 2
        %v1878 = vsel %vm711, %v1875, %v1877
        %v1879 = vrot.slane %v1761, 2
        %v1880 = vrot.slane %v1762, 2
        %v1881 = vsel %vm711, %v1879, %v1880
        %v1882 = vrot.slane %v1763, 2
        %v1883 = vsel %vm711, %v1880, %v1882
        %v1884 = vrot.slane %v1764, 2
        %v1885 = vrot.slane %v1765, 2
        %v1886 = vsel %vm711, %v1884, %v1885
        %v1887 = vrot.slane %v1766, 2
        %v1888 = vsel %vm711, %v1885, %v1887
        %v1889 = vrot.slane %v1767, 2
        %v1890 = vrot.slane %v1768, 2
        %v1891 = vsel %vm711, %v1889, %v1890
        %v1892 = vrot.slane %v1769, 2
        %v1893 = vsel %vm711, %v1890, %v1892
        %v1894 = vrot.slane %v1770, 2
        %v1895 = vrot.slane %v1771, 2
        %v1896 = vsel %vm711, %v1894, %v1895
        %v1897 = vrot.slane %v1772, 2
        %v1898 = vsel %vm711, %v1895, %v1897
        %v1899 = vrot.slane %v1773, 2
        %v1900 = vrot.slane %v1774, 2
        %v1901 = vsel %vm711, %v1899, %v1900
        %v1902 = vrot.slane %v1775, 2
        %v1903 = vsel %vm711, %v1900, %v1902
        %v1936 = vadd.f32 %v1692, %v1826
        %v1937 = vadd.f32 %v1693, %v1828
        %v1938 = vadd.f32 %v1694, %v1831
        %v1939 = vadd.f32 %v1695, %v1833
        %v1940 = vadd.f32 %v1696, %v1836
        %v1941 = vadd.f32 %v1697, %v1838
        %v1942 = vadd.f32 %v1698, %v1841
        %v1943 = vadd.f32 %v1699, %v1843
        %v1944 = vadd.f32 %v1700, %v1846
        %v1945 = vadd.f32 %v1701, %v1848
        %v1946 = vadd.f32 %v1702, %v1851
        %v1947 = vadd.f32 %v1703, %v1853
        %v1948 = vadd.f32 %v1704, %v1856
        %v1949 = vadd.f32 %v1705, %v1858
        %v1950 = vadd.f32 %v1706, %v1861
        %v1951 = vadd.f32 %v1707, %v1863
        %v1952 = vadd.f32 %v1708, %v1866
        %v1953 = vadd.f32 %v1709, %v1868
        %v1954 = vadd.f32 %v1710, %v1871
        %v1955 = vadd.f32 %v1711, %v1873
        %v1956 = vadd.f32 %v1712, %v1876
        %v1957 = vadd.f32 %v1713, %v1878
        %v1958 = vadd.f32 %v1714, %v1881
        %v1959 = vadd.f32 %v1715, %v1883
        %v1960 = vadd.f32 %v1716, %v1886
        %v1961 = vadd.f32 %v1717, %v1888
        %v1962 = vadd.f32 %v1718, %v1891
        %v1963 = vadd.f32 %v1719, %v1893
        %v1964 = vadd.f32 %v1720, %v1896
        %v1965 = vadd.f32 %v1721, %v1898
        %v1966 = vadd.f32 %v1722, %v1901
        %v1967 = vadd.f32 %v1723, %v1903
        %v1968 = vld [vmem:[%s2] sm:$0x1]
        %v1970 = vlaneseq
        %v1971 = vshrl.u32 %v1970, 7
        %v1972 = vsub.s32 0, %v1971
        %v1973 = vrot.slane %v1968, %v1972
        %v1975 = vadd.f32 %v1936, %v1973
        %v1976 = vadd.f32 %v1937, %v1973
        %v1977 = vadd.f32 %v1938, %v1973
        %v1978 = vadd.f32 %v1939, %v1973
        %v1979 = vadd.f32 %v1940, %v1973
        %v1980 = vadd.f32 %v1941, %v1973
        %v1981 = vadd.f32 %v1942, %v1973
        %v1982 = vadd.f32 %v1943, %v1973
        %v1983 = vadd.f32 %v1944, %v1973
        %v1984 = vadd.f32 %v1945, %v1973
        %v1985 = vadd.f32 %v1946, %v1973
        %v1986 = vadd.f32 %v1947, %v1973
        %v1987 = vadd.f32 %v1948, %v1973
        %v1988 = vadd.f32 %v1949, %v1973
        %v1989 = vadd.f32 %v1950, %v1973
        %v1990 = vadd.f32 %v1951, %v1973
        %v1991 = vadd.f32 %v1952, %v1973
        %v1992 = vadd.f32 %v1953, %v1973
        %v1993 = vadd.f32 %v1954, %v1973
        %v1994 = vadd.f32 %v1955, %v1973
        %v1995 = vadd.f32 %v1956, %v1973
        %v1996 = vadd.f32 %v1957, %v1973
        %v1997 = vadd.f32 %v1958, %v1973
        %v1998 = vadd.f32 %v1959, %v1973
        %v1999 = vadd.f32 %v1960, %v1973
        %v2000 = vadd.f32 %v1961, %v1973
        %v2001 = vadd.f32 %v1962, %v1973
        %v2002 = vadd.f32 %v1963, %v1973
        %v2003 = vadd.f32 %v1964, %v1973
        %v2004 = vadd.f32 %v1965, %v1973
        %v2005 = vadd.f32 %v1966, %v1973
        %v2006 = vadd.f32 %v1967, %v1973
        %v2007 = vmax.f32 %v1975, 0.0
        %v2008 = vmax.f32 %v1976, 0.0
        %v2009 = vmax.f32 %v1977, 0.0
        %v2010 = vmax.f32 %v1978, 0.0
        %v2011 = vmax.f32 %v1979, 0.0
        %v2012 = vmax.f32 %v1980, 0.0
        %v2013 = vmax.f32 %v1981, 0.0
        %v2014 = vmax.f32 %v1982, 0.0
        %v2015 = vmax.f32 %v1983, 0.0
        %v2016 = vmax.f32 %v1984, 0.0
        %v2017 = vmax.f32 %v1985, 0.0
        %v2018 = vmax.f32 %v1986, 0.0
        %v2019 = vmax.f32 %v1987, 0.0
        %v2020 = vmax.f32 %v1988, 0.0
        %v2021 = vmax.f32 %v1989, 0.0
        %v2022 = vmax.f32 %v1990, 0.0
        %v2023 = vmax.f32 %v1991, 0.0
        %v2024 = vmax.f32 %v1992, 0.0
        %v2025 = vmax.f32 %v1993, 0.0
        %v2026 = vmax.f32 %v1994, 0.0
        %v2027 = vmax.f32 %v1995, 0.0
        %v2028 = vmax.f32 %v1996, 0.0
        %v2029 = vmax.f32 %v1997, 0.0
        %v2030 = vmax.f32 %v1998, 0.0
        %v2031 = vmax.f32 %v1999, 0.0
        %v2032 = vmax.f32 %v2000, 0.0
        %v2033 = vmax.f32 %v2001, 0.0
        %v2034 = vmax.f32 %v2002, 0.0
        %v2035 = vmax.f32 %v2003, 0.0
        %v2036 = vmax.f32 %v2004, 0.0
        %v2037 = vmax.f32 %v2005, 0.0
        %v2038 = vmax.f32 %v2006, 0.0
        %v2039 = vld [vmem:[%s3] sm:$0xff]
        %v2040 = vld [vmem:[%s3 + $0x8] sm:$0xff]
        %v2041 = vld [vmem:[%s3 + $0x10] sm:$0xff]
        %v2042 = vld [vmem:[%s3 + $0x18] sm:$0xff]
        %v2043 = vld [vmem:[%s3 + $0x20] sm:$0xff]
        %v2044 = vld [vmem:[%s3 + $0x28] sm:$0xff]
        %v2045 = vld [vmem:[%s3 + $0x30] sm:$0xff]
        %v2046 = vld [vmem:[%s3 + $0x38] sm:$0xff]
        %v2047 = vld [vmem:[%s3 + $0x40] sm:$0xff]
        %v2048 = vld [vmem:[%s3 + $0x48] sm:$0xff]
        %v2049 = vld [vmem:[%s3 + $0x50] sm:$0xff]
        %v2050 = vld [vmem:[%s3 + $0x58] sm:$0xff]
        %v2051 = vld [vmem:[%s3 + $0x60] sm:$0xff]
        %v2052 = vld [vmem:[%s3 + $0x68] sm:$0xff]
        %v2053 = vld [vmem:[%s3 + $0x70] sm:$0xff]
        %v2054 = vld [vmem:[%s3 + $0x78] sm:$0xff]
        %v2055 = vld [vmem:[%s4] sm:$0x1]
        %v2057 = vlaneseq
        %v2058 = vshrl.u32 %v2057, 7
        %v2059 = vsub.s32 0, %v2058
        %v2060 = vrot.slane %v2055, %v2059
        %2062 = vmatprep.subr.mxu0 0.0
        %2063 = vmatpush1.msra.mxu0 %v2039
        %2064 = vmatprep.subr.mxu0 0.0
        %2065 = vmatpush1.msra.mxu0 %v2040
        %2066 = vmatprep.subr.mxu0 0.0
        %2067 = vmatpush1.msra.mxu0 %v2041
        %2068 = vmatprep.subr.mxu0 0.0
        %2069 = vmatpush1.msra.mxu0 %v2042
        %2070 = vmatprep.subr.mxu0 0.0
        %2071 = vmatpush1.msra.mxu0 %v2043
        %2072 = vmatprep.subr.mxu0 0.0
        %2073 = vmatpush1.msra.mxu0 %v2044
        %2074 = vmatprep.subr.mxu0 0.0
        %2075 = vmatpush1.msra.mxu0 %v2045
        %2076 = vmatprep.subr.mxu0 0.0
        %2077 = vmatpush1.msra.mxu0 %v2046
        %2078 = vmatprep.subr.mxu0 0.0
        %2079 = vmatpush1.msra.mxu0 %v2047
        %2080 = vmatprep.subr.mxu0 0.0
        %2081 = vmatpush1.msra.mxu0 %v2048
        %2082 = vmatprep.subr.mxu0 0.0
        %2083 = vmatpush1.msra.mxu0 %v2049
        %2084 = vmatprep.subr.mxu0 0.0
        %2085 = vmatpush1.msra.mxu0 %v2050
        %2086 = vmatprep.subr.mxu0 0.0
        %2087 = vmatpush1.msra.mxu0 %v2051
        %2088 = vmatprep.subr.mxu0 0.0
        %2089 = vmatpush1.msra.mxu0 %v2052
        %2090 = vmatprep.subr.mxu0 0.0
        %2091 = vmatpush1.msra.mxu0 %v2053
        %2092 = vmatprep.subr.mxu0 0.0
        %2093 = vmatpush1.msra.mxu0 %v2054
        %2094 = vmatprep.subr.mxu0 0.0
        %2095 = vmatpush1.msra.mxu0 0.0
        %2096 = vmatprep.subr.mxu0 0.0
        %2097 = vmatpush1.msra.mxu0 0.0
        %2098 = vmatprep.subr.mxu0 0.0
        %2099 = vmatpush1.msra.mxu0 0.0
        %2100 = vmatprep.subr.mxu0 0.0
        %2101 = vmatpush1.msra.mxu0 0.0
        %2102 = vmatprep.subr.mxu0 0.0
        %2103 = vmatpush1.msra.mxu0 0.0
        %2104 = vmatprep.subr.mxu0 0.0
        %2105 = vmatpush1.msra.mxu0 0.0
        %2106 = vmatprep.subr.mxu0 0.0
        %2107 = vmatpush1.msra.mxu0 0.0
        %2108 = vmatprep.subr.mxu0 0.0
        %2109 = vmatpush1.msra.mxu0 0.0
        %2110 = vmatprep.subr.mxu0 0.0
        %2111 = vmatpush1.msra.mxu0 0.0
        %2112 = vmatprep.subr.mxu0 0.0
        %2113 = vmatpush1.msra.mxu0 0.0
        %2114 = vmatprep.subr.mxu0 0.0
        %2115 = vmatpush1.msra.mxu0 0.0
        %2116 = vmatprep.subr.mxu0 0.0
        %2117 = vmatpush1.msra.mxu0 0.0
        %2118 = vmatprep.subr.mxu0 0.0
        %2119 = vmatpush1.msra.mxu0 0.0
        %2120 = vmatprep.subr.mxu0 0.0
        %2121 = vmatpush1.msra.mxu0 0.0
        %2122 = vmatprep.subr.mxu0 0.0
        %2123 = vmatpush1.msra.mxu0 0.0
        %2124 = vmatprep.subr.mxu0 0.0
        %2125 = vmatpush1.msra.mxu0 0.0
        %2126 = vmatprep.mubr.f32.mxu0 0.0
        %2127 = vmatmul.mubr.f32.gmra.mrb[0].mxu0 %v2007
        %v2128 = vpop.f32.mrb[0].mxu0
        %v2129 = vadd.f32 %v2060, %v2128
        %v2130 = vpop.f32.mrb[0].mxu0
        %2131 = vmatprep.mubr.f32.mxu0 0.0
        %2132 = vmatmul.mubr.f32.gmra.mrb[0].mxu0 %v2008
        %v2133 = vpop.f32.mrb[0].mxu0
        %v2134 = vadd.f32 %v2060, %v2133
        %v2135 = vpop.f32.mrb[0].mxu0
        %2136 = vmatprep.mubr.f32.mxu0 0.0
        %2137 = vmatmul.mubr.f32.gmra.mrb[0].mxu0 %v2009
        %v2138 = vpop.f32.mrb[0].mxu0
        %v2139 = vadd.f32 %v2060, %v2138
        %v2140 = vpop.f32.mrb[0].mxu0
        %2141 = vmatprep.mubr.f32.mxu0 0.0
        %2142 = vmatmul.mubr.f32.gmra.mrb[0].mxu0 %v2010
        %v2143 = vpop.f32.mrb[0].mxu0
        %v2144 = vadd.f32 %v2060, %v2143
        %v2145 = vpop.f32.mrb[0].mxu0
        %2146 = vmatprep.mubr.f32.mxu0 0.0
        %2147 = vmatmul.mubr.f32.gmra.mrb[0].mxu0 %v2011
        %v2148 = vpop.f32.mrb[0].mxu0
        %v2149 = vadd.f32 %v2060, %v2148
        %v2150 = vpop.f32.mrb[0].mxu0
        %2151 = vmatprep.mubr.f32.mxu0 0.0
        %2152 = vmatmul.mubr.f32.gmra.mrb[0].mxu0 %v2012
        %v2153 = vpop.f32.mrb[0].mxu0
        %v2154 = vadd.f32 %v2060, %v2153
        %v2155 = vpop.f32.mrb[0].mxu0
        %2156 = vmatprep.mubr.f32.mxu0 0.0
        %2157 = vmatmul.mubr.f32.gmra.mrb[0].mxu0 %v2013
        %v2158 = vpop.f32.mrb[0].mxu0
        %v2159 = vadd.f32 %v2060, %v2158
        %v2160 = vpop.f32.mrb[0].mxu0
        %2161 = vmatprep.mubr.f32.mxu0 0.0
        %2162 = vmatmul.mubr.f32.gmra.mrb[0].mxu0 %v2014
        %v2163 = vpop.f32.mrb[0].mxu0
        %v2164 = vadd.f32 %v2060, %v2163
        %v2165 = vpop.f32.mrb[0].mxu0
        %2166 = vmatprep.mubr.f32.mxu0 0.0
        %2167 = vmatmul.mubr.f32.gmra.mrb[0].mxu0 %v2015
        %v2168 = vpop.f32.mrb[0].mxu0
        %v2169 = vadd.f32 %v2060, %v2168
        %v2170 = vpop.f32.mrb[0].mxu0
        %2171 = vmatprep.mubr.f32.mxu0 0.0
        %2172 = vmatmul.mubr.f32.gmra.mrb[0].mxu0 %v2016
        %v2173 = vpop.f32.mrb[0].mxu0
        %v2174 = vadd.f32 %v2060, %v2173
        %v2175 = vpop.f32.mrb[0].mxu0
        %2176 = vmatprep.mubr.f32.mxu0 0.0
        %2177 = vmatmul.mubr.f32.gmra.mrb[0].mxu0 %v2017
        %v2178 = vpop.f32.mrb[0].mxu0
        %v2179 = vadd.f32 %v2060, %v2178
        %v2180 = vpop.f32.mrb[0].mxu0
        %2181 = vmatprep.mubr.f32.mxu0 0.0
        %2182 = vmatmul.mubr.f32.gmra.mrb[0].mxu0 %v2018
        %v2183 = vpop.f32.mrb[0].mxu0
        %v2184 = vadd.f32 %v2060, %v2183
        %v2185 = vpop.f32.mrb[0].mxu0
        %2186 = vmatprep.mubr.f32.mxu0 0.0
        %2187 = vmatmul.mubr.f32.gmra.mrb[0].mxu0 %v2019
        %v2188 = vpop.f32.mrb[0].mxu0
        %v2189 = vadd.f32 %v2060, %v2188
        %v2190 = vpop.f32.mrb[0].mxu0
        %2191 = vmatprep.mubr.f32.mxu0 0.0
        %2192 = vmatmul.mubr.f32.gmra.mrb[0].mxu0 %v2020
        %v2193 = vpop.f32.mrb[0].mxu0
        %v2194 = vadd.f32 %v2060, %v2193
        %v2195 = vpop.f32.mrb[0].mxu0
        %2196 = vmatprep.mubr.f32.mxu0 0.0
        %2197 = vmatmul.mubr.f32.gmra.mrb[0].mxu0 %v2021
        %v2198 = vpop.f32.mrb[0].mxu0
        %v2199 = vadd.f32 %v2060, %v2198
        %v2200 = vpop.f32.mrb[0].mxu0
        %2201 = vmatprep.mubr.f32.mxu0 0.0
        %2202 = vmatmul.mubr.f32.gmra.mrb[0].mxu0 %v2022
        %v2203 = vpop.f32.mrb[0].mxu0
        %v2204 = vadd.f32 %v2060, %v2203
        %v2205 = vpop.f32.mrb[0].mxu0
        %2206 = vmatprep.mubr.f32.mxu0 0.0
        %2207 = vmatmul.mubr.f32.gmra.mrb[0].mxu0 %v2023
        %v2208 = vpop.f32.mrb[0].mxu0
        %v2209 = vadd.f32 %v2060, %v2208
        %v2210 = vpop.f32.mrb[0].mxu0
        %2211 = vmatprep.mubr.f32.mxu0 0.0
        %2212 = vmatmul.mubr.f32.gmra.mrb[0].mxu0 %v2024
        %v2213 = vpop.f32.mrb[0].mxu0
        %v2214 = vadd.f32 %v2060, %v2213
        %v2215 = vpop.f32.mrb[0].mxu0
        %2216 = vmatprep.mubr.f32.mxu0 0.0
        %2217 = vmatmul.mubr.f32.gmra.mrb[0].mxu0 %v2025
        %v2218 = vpop.f32.mrb[0].mxu0
        %v2219 = vadd.f32 %v2060, %v2218
        %v2220 = vpop.f32.mrb[0].mxu0
        %2221 = vmatprep.mubr.f32.mxu0 0.0
        %2222 = vmatmul.mubr.f32.gmra.mrb[0].mxu0 %v2026
        %v2223 = vpop.f32.mrb[0].mxu0
        %v2224 = vadd.f32 %v2060, %v2223
        %v2225 = vpop.f32.mrb[0].mxu0
        %2226 = vmatprep.mubr.f32.mxu0 0.0
        %2227 = vmatmul.mubr.f32.gmra.mrb[0].mxu0 %v2027
        %v2228 = vpop.f32.mrb[0].mxu0
        %v2229 = vadd.f32 %v2060, %v2228
        %v2230 = vpop.f32.mrb[0].mxu0
        %2231 = vmatprep.mubr.f32.mxu0 0.0
        %2232 = vmatmul.mubr.f32.gmra.mrb[0].mxu0 %v2028
        %v2233 = vpop.f32.mrb[0].mxu0
        %v2234 = vadd.f32 %v2060, %v2233
        %v2235 = vpop.f32.mrb[0].mxu0
        %2236 = vmatprep.mubr.f32.mxu0 0.0
        %2237 = vmatmul.mubr.f32.gmra.mrb[0].mxu0 %v2029
        %v2238 = vpop.f32.mrb[0].mxu0
        %v2239 = vadd.f32 %v2060, %v2238
        %v2240 = vpop.f32.mrb[0].mxu0
        %2241 = vmatprep.mubr.f32.mxu0 0.0
        %2242 = vmatmul.mubr.f32.gmra.mrb[0].mxu0 %v2030
        %v2243 = vpop.f32.mrb[0].mxu0
        %v2244 = vadd.f32 %v2060, %v2243
        %v2245 = vpop.f32.mrb[0].mxu0
        %2246 = vmatprep.mubr.f32.mxu0 0.0
        %2247 = vmatmul.mubr.f32.gmra.mrb[0].mxu0 %v2031
        %v2248 = vpop.f32.mrb[0].mxu0
        %v2249 = vadd.f32 %v2060, %v2248
        %v2250 = vpop.f32.mrb[0].mxu0
        %2251 = vmatprep.mubr.f32.mxu0 0.0
        %2252 = vmatmul.mubr.f32.gmra.mrb[0].mxu0 %v2032
        %v2253 = vpop.f32.mrb[0].mxu0
        %v2254 = vadd.f32 %v2060, %v2253
        %v2255 = vpop.f32.mrb[0].mxu0
        %2256 = vmatprep.mubr.f32.mxu0 0.0
        %2257 = vmatmul.mubr.f32.gmra.mrb[0].mxu0 %v2033
        %v2258 = vpop.f32.mrb[0].mxu0
        %v2259 = vadd.f32 %v2060, %v2258
        %v2260 = vpop.f32.mrb[0].mxu0
        %2261 = vmatprep.mubr.f32.mxu0 0.0
        %2262 = vmatmul.mubr.f32.gmra.mrb[0].mxu0 %v2034
        %v2263 = vpop.f32.mrb[0].mxu0
        %v2264 = vadd.f32 %v2060, %v2263
        %v2265 = vpop.f32.mrb[0].mxu0
        %2266 = vmatprep.mubr.f32.mxu0 0.0
        %2267 = vmatmul.mubr.f32.gmra.mrb[0].mxu0 %v2035
        %v2268 = vpop.f32.mrb[0].mxu0
        %v2269 = vadd.f32 %v2060, %v2268
        %v2270 = vpop.f32.mrb[0].mxu0
        %2271 = vmatprep.mubr.f32.mxu0 0.0
        %2272 = vmatmul.mubr.f32.gmra.mrb[0].mxu0 %v2036
        %v2273 = vpop.f32.mrb[0].mxu0
        %v2274 = vadd.f32 %v2060, %v2273
        %v2275 = vpop.f32.mrb[0].mxu0
        %2276 = vmatprep.mubr.f32.mxu0 0.0
        %2277 = vmatmul.mubr.f32.gmra.mrb[0].mxu0 %v2037
        %v2278 = vpop.f32.mrb[0].mxu0
        %v2279 = vadd.f32 %v2060, %v2278
        %v2280 = vpop.f32.mrb[0].mxu0
        %2281 = vmatprep.mubr.f32.mxu0 0.0
        %2282 = vmatmul.mubr.f32.gmra.mrb[0].mxu0 %v2038
        %v2283 = vpop.f32.mrb[0].mxu0
        %v2284 = vadd.f32 %v2060, %v2283
        %v2285 = vpop.f32.mrb[0].mxu0
        %2286 = vdwg.mxu0
        %v2287 = vmax.f32 %v2129, 0.0
        %v2288 = vmax.f32 %v2134, 0.0
        %v2289 = vmax.f32 %v2139, 0.0
        %v2290 = vmax.f32 %v2144, 0.0
        %v2291 = vmax.f32 %v2149, 0.0
        %v2292 = vmax.f32 %v2154, 0.0
        %v2293 = vmax.f32 %v2159, 0.0
        %v2294 = vmax.f32 %v2164, 0.0
        %v2295 = vmax.f32 %v2169, 0.0
        %v2296 = vmax.f32 %v2174, 0.0
        %v2297 = vmax.f32 %v2179, 0.0
        %v2298 = vmax.f32 %v2184, 0.0
        %v2299 = vmax.f32 %v2189, 0.0
        %v2300 = vmax.f32 %v2194, 0.0
        %v2301 = vmax.f32 %v2199, 0.0
        %v2302 = vmax.f32 %v2204, 0.0
        %v2303 = vmax.f32 %v2209, 0.0
        %v2304 = vmax.f32 %v2214, 0.0
        %v2305 = vmax.f32 %v2219, 0.0
        %v2306 = vmax.f32 %v2224, 0.0
        %v2307 = vmax.f32 %v2229, 0.0
        %v2308 = vmax.f32 %v2234, 0.0
        %v2309 = vmax.f32 %v2239, 0.0
        %v2310 = vmax.f32 %v2244, 0.0
        %v2311 = vmax.f32 %v2249, 0.0
        %v2312 = vmax.f32 %v2254, 0.0
        %v2313 = vmax.f32 %v2259, 0.0
        %v2314 = vmax.f32 %v2264, 0.0
        %v2315 = vmax.f32 %v2269, 0.0
        %v2316 = vmax.f32 %v2274, 0.0
        %v2317 = vmax.f32 %v2279, 0.0
        %v2318 = vmax.f32 %v2284, 0.0
        %2319 = vst [vmem:[%s231] sm:$0xff] %v2287
        %2320 = vst [vmem:[%s231 + $0x8] sm:$0xff] %v2288
        %2321 = vst [vmem:[%s231 + $0x10] sm:$0xff] %v2289
        %2322 = vst [vmem:[%s231 + $0x18] sm:$0xff] %v2290
        %2323 = vst [vmem:[%s231 + $0x20] sm:$0xff] %v2291
        %2324 = vst [vmem:[%s231 + $0x28] sm:$0xff] %v2292
        %2325 = vst [vmem:[%s231 + $0x30] sm:$0xff] %v2293
        %2326 = vst [vmem:[%s231 + $0x38] sm:$0xff] %v2294
        %2327 = vst [vmem:[%s231 + $0x40] sm:$0xff] %v2295
        %2328 = vst [vmem:[%s231 + $0x48] sm:$0xff] %v2296
        %2329 = vst [vmem:[%s231 + $0x50] sm:$0xff] %v2297
        %2330 = vst [vmem:[%s231 + $0x58] sm:$0xff] %v2298
        %2331 = vst [vmem:[%s231 + $0x60] sm:$0xff] %v2299
        %2332 = vst [vmem:[%s231 + $0x68] sm:$0xff] %v2300
        %2333 = vst [vmem:[%s231 + $0x70] sm:$0xff] %v2301
        %2334 = vst [vmem:[%s231 + $0x78] sm:$0xff] %v2302
        %2335 = vst [vmem:[%s231 + $0x80] sm:$0xff] %v2303
        %2336 = vst [vmem:[%s231 + $0x88] sm:$0xff] %v2304
        %2337 = vst [vmem:[%s231 + $0x90] sm:$0xff] %v2305
        %2338 = vst [vmem:[%s231 + $0x98] sm:$0xff] %v2306
        %2339 = vst [vmem:[%s231 + $0xa0] sm:$0xff] %v2307
        %2340 = vst [vmem:[%s231 + $0xa8] sm:$0xff] %v2308
        %2341 = vst [vmem:[%s231 + $0xb0] sm:$0xff] %v2309
        %2342 = vst [vmem:[%s231 + $0xb8] sm:$0xff] %v2310
        %2343 = vst [vmem:[%s231 + $0xc0] sm:$0xff] %v2311
        %2344 = vst [vmem:[%s231 + $0xc8] sm:$0xff] %v2312
        %2345 = vst [vmem:[%s231 + $0xd0] sm:$0xff] %v2313
        %2346 = vst [vmem:[%s231 + $0xd8] sm:$0xff] %v2314
        %2347 = vst [vmem:[%s231 + $0xe0] sm:$0xff] %v2315
        %2348 = vst [vmem:[%s231 + $0xe8] sm:$0xff] %v2316
        %2349 = vst [vmem:[%s231 + $0xf0] sm:$0xff] %v2317
        %2350 = vst [vmem:[%s231 + $0xf8] sm:$0xff] %v2318
        %s2351 = sand.u32 %s151, 1
        %s2352 = scalar_lea.sflag [#allocation3], %s2351
        %s2353 = sand.u32 %s151, 1
        %s2354 = smul.addr %s2353, 256
        %s2355 = scalar_lea.vmem [#allocation2], %s2354
        // Predicated region
        $region41: #{tpu_custom_call.1} parent=39 // pred_check
          %p2356 = pneg %p161
        $region42: #{tpu_custom_call.1} parent=39 // pred_check_branch
          %2358 = sbr.rel (%p2356) target = $region44
        $region43: #{tpu_custom_call.1} parent=39 // pred_region
          %s2359 = smul.u32 16, %s24
          %s2361 = ssub.s32 4096, 4096
          %2362 = vsyncadd %s2352, %s2361
          %s2363 = smul.addr %s2359, 2
          %s2364 = smul.addr %s23, 32
          %s2365 = sadd.s32 %s2363, %s2364
          %s2366 = smul.addr %s2365, 128
          %s2367 = scalar_lea.hbm %s5, %s2366
          %s2368 = sshll.u32 %s2355, 4
          %s2369 = int_to_ptr.vmem [resolvable:$true] %s2368
          %2374 = dma.vmem_to_hbm [thread:$0]  %s2369, 4096, %s2367, %s2352, 128, 128, 8
        $region44: #{tpu_custom_call.1} parent=39 // pred_fallthru
          _
      $region40: #{tpu_custom_call.1} parent=5 // pred_fallthru
        _
      %p2375 = scmp.le.s32.totalorder 2, %s14
      // Predicated region
      $region45: #{tpu_custom_call.1} parent=5 // pred_check
        %p2376 = pneg %p2375
      $region46: #{tpu_custom_call.1} parent=5 // pred_check_branch
        %2378 = sbr.rel (%p2376) target = $region48
      $region47: #{tpu_custom_call.1} parent=5 // pred_region
        %s2379 = ssub.s32 %s14, 2
        // Predicated region
        $region49: #{tpu_custom_call.1} parent=47 // pred_check
          %p2380 = pneg %p167
        $region50: #{tpu_custom_call.1} parent=47 // pred_check_branch
          %2382 = sbr.rel (%p2380) target = $region52
        $region51: #{tpu_custom_call.1} parent=47 // pred_region
          %s2383 = sand.u32 %s152, 1
          %s2384 = scalar_lea.sflag [#allocation3], %s2383
          %s2385 = sand.u32 %s152, 1
          %s2386 = smul.addr %s2385, 256
          %s2387 = scalar_lea.vmem [#allocation2], %s2386
          %2388 = dma.done %s2384, 4096
        $region52: #{tpu_custom_call.1} parent=47 // pred_fallthru
          _
      $region48: #{tpu_custom_call.1} parent=5 // pred_fallthru
        _
    $region6: #{tpu_custom_call.1} parent=1 // loop_footer
      %s18 = sadd.s32 1, %s14
    $region7: #{tpu_custom_call.1} parent=1 // loop_footer_branch
      %13 = sbr.rel target = $region3
    $region8: #{tpu_custom_call.1} parent=1 // loop_exit
      _
    %2389 = vsyncpa [#allocation3], 1
    %s2390 = scalar_lea.sflag [#allocation3], 1
    %2391 = vsyncpa %s2390, 1

</llo_original>
